<compile_context>
chip_gen: v6e
topology: v6e:2x2x1
jax: 0.10.0
libtpu: 0.0.40
codegen_flags: <defaults>
</compile_context>

<pallas_src>
import functools

import jax
import jax.numpy as jnp
from jax import lax
from jax.experimental import pallas as pl
from jax.experimental.pallas import tpu as pltpu


BACKBONE_CH = 2048          # ResNet50 final channel count
FEAT_DIM = 2 * BACKBONE_CH  # AFIM stand-in: concat(avg, max) -> 4096
BOTTLENECK = 512
BN_EPS = 1e-5
STEM_K_PAD = 128            # conv input channels padded to a full lane tile
VMEM_LIMIT = 32 * 1024 * 1024   # safe on v5e/v6e (128 MiB) and v7x (64 MiB)


# ----------------------------------------------------------------------------
# Kernel 1: fused stem (1x1 conv as MXU dot) + ReLU + global avg/max pooling.
#   Grid over output-channel slabs only; the whole (2B*HW, 128) bf16 input is
#   tiny and stays resident.  HW is processed in 16-row chunks with running
#   sum/max accumulators (a few vregs live), then one full (2*B2, tn) store.
# ----------------------------------------------------------------------------
def _stem_pool_kernel(x_ref, w_ref, b_ref, out_ref, *, n_batch, hw, chunk):
    w = w_ref[...]                       # (K_pad, tn) bf16
    bias = b_ref[...]                    # (1, tn)     f32
    tn = w.shape[1]
    n_chunks = hw // chunk
    inv_hw = 1.0 / float(hw)

    rows = []
    for b in range(n_batch):
        base = b * hw

        def body(c, carry, base=base):
            acc_sum, acc_max = carry
            start = pl.multiple_of(base + c * chunk, chunk)
            xc = x_ref[pl.ds(start, chunk), :]                 # (chunk, K_pad) bf16
            y = jnp.dot(xc, w, preferred_element_type=jnp.float32)
            y = jnp.maximum(y + bias, 0.0)                     # ReLU
            return acc_sum + y, jnp.maximum(acc_max, y)

        init = (jnp.zeros((chunk, tn), jnp.float32),
                jnp.zeros((chunk, tn), jnp.float32))           # ReLU out >= 0
        acc_sum, acc_max = lax.fori_loop(0, n_chunks, body, init)

        rows.append(jnp.sum(acc_sum, axis=0, keepdims=True) * inv_hw)  # avg
        rows.append(jnp.max(acc_max, axis=0, keepdims=True))           # max

    # One unmasked, lane/sublane-dense store of the whole (2*n_batch, tn) tile.
    out_ref[...] = jnp.concatenate(rows, axis=0)


def pallas_stem_pool(x_pad, w, b, *, n_batch, hw, tn=512, chunk=16):
    """x_pad: (n_batch*hw, 128) bf16; w: (128, C_out) bf16; b: (1, C_out) f32.
    Returns (2*n_batch, C_out) f32 with rows [b0_avg, b0_max, b1_avg, ...]."""
    total_rows, k_pad = x_pad.shape
    k_pad2, c_out = w.shape
    assert total_rows == n_batch * hw and k_pad == k_pad2
    assert c_out % tn == 0 and hw % chunk == 0
    kernel = functools.partial(_stem_pool_kernel, n_batch=n_batch, hw=hw,
                               chunk=chunk)
    return pl.pallas_call(
        kernel,
        out_shape=jax.ShapeDtypeStruct((2 * n_batch, c_out), jnp.float32),
        grid_spec=pltpu.PrefetchScalarGridSpec(
            num_scalar_prefetch=0,
            grid=(c_out // tn,),
            in_specs=[
                pl.BlockSpec((total_rows, k_pad), lambda j: (0, 0)),
                pl.BlockSpec((k_pad, tn), lambda j: (0, j)),
                pl.BlockSpec((1, tn), lambda j: (0, j)),
            ],
            out_specs=pl.BlockSpec((2 * n_batch, tn), lambda j: (0, j)),
        ),
        compiler_params=pltpu.CompilerParams(
            dimension_semantics=("parallel",),
            vmem_limit_bytes=VMEM_LIMIT,
        ),
    )(x_pad, w, b)


# ----------------------------------------------------------------------------
# Kernel 2: fused ClassBlock — Linear(4096,512)+folded BN, then
#   Linear(512, N_pad).  K tiled (fp32 accumulator), N1 split into parallel
#   column slabs (v7x dual TensorCore); per-slab partial logits summed in the
#   wrapper.  bf16 MXU inputs, fp32 accumulation.
# ----------------------------------------------------------------------------
def _classblock_kernel(f_ref, w1_ref, b1_ref, w2_ref, part_ref, h_ref, acc_ref):
    k = pl.program_id(1)

    @pl.when(k == 0)
    def _():
        acc_ref[...] = jnp.zeros_like(acc_ref)

    acc_ref[...] += jnp.dot(
        f_ref[...].astype(jnp.bfloat16), w1_ref[...],
        preferred_element_type=jnp.float32)

    @pl.when(k == pl.num_programs(1) - 1)
    def _():
        h = acc_ref[...] + b1_ref[...]
        h_ref[...] = h
        part_ref[...] = jnp.dot(
            h.astype(jnp.bfloat16), w2_ref[...],
            preferred_element_type=jnp.float32)[None]


def pallas_classblock(f_pad, w1, b1, w2, *, tk=1024, n1_blocks=2):
    """f_pad: (M_pad, 4096) f32; w1: (4096, 512) bf16; b1: (1, 512) f32;
    w2: (512, N_pad) bf16.  Returns (padded logits (M_pad, N_pad),
    bottleneck feature (M_pad, 512))."""
    M, K = f_pad.shape
    K2, N1 = w1.shape
    N12, N2 = w2.shape
    assert K == K2 and N1 == N12
    assert K % tk == 0 and N1 % n1_blocks == 0 and M % 8 == 0
    tn1 = N1 // n1_blocks

    partial, h = pl.pallas_call(
        _classblock_kernel,
        out_shape=(
            jax.ShapeDtypeStruct((n1_blocks, M, N2), jnp.float32),  # partial logits
            jax.ShapeDtypeStruct((M, N1), jnp.float32),             # bottleneck feat
        ),
        grid_spec=pltpu.PrefetchScalarGridSpec(
            num_scalar_prefetch=0,
            grid=(n1_blocks, K // tk),
            in_specs=[
                pl.BlockSpec((M, tk), lambda n, k: (0, k)),
                pl.BlockSpec((tk, tn1), lambda n, k: (k, n)),
                pl.BlockSpec((1, tn1), lambda n, k: (0, n)),
                pl.BlockSpec((tn1, N2), lambda n, k: (n, 0)),
            ],
            out_specs=[
                pl.BlockSpec((1, M, N2), lambda n, k: (n, 0, 0)),
                pl.BlockSpec((M, tn1), lambda n, k: (0, n)),
            ],
            scratch_shapes=[pltpu.VMEM((M, tn1), jnp.float32)],
        ),
        compiler_params=pltpu.CompilerParams(
            dimension_semantics=("parallel", "arbitrary"),
            vmem_limit_bytes=VMEM_LIMIT,
        ),
    )(f_pad, w1, b1, w2)

    logits_pad = jnp.sum(partial, axis=0)   # (M, N2): tiny XLA add of 2 slabs
    return logits_pad, h


# ----------------------------------------------------------------------------
# Parameters: raw init + one-time prep (BN fold, bf16 casts, padding).
# ----------------------------------------------------------------------------
def init_params(key, in_ch, class_num):
    k0, k1, k2 = jax.random.split(key, 3)
    return {
        # backbone stem: 1x1 conv == per-pixel linear (in_ch -> 2048)
        "conv_w": jax.random.normal(k0, (in_ch, BACKBONE_CH), jnp.float32) * 0.05,
        "conv_b": jnp.zeros((BACKBONE_CH,), jnp.float32),
        # ClassBlock: Linear(4096,512) + BN1d(512) + Linear(512, class_num)
        "fc1_w": jax.random.normal(k1, (FEAT_DIM, BOTTLENECK), jnp.float32) * 0.02,
        "fc1_b": jnp.zeros((BOTTLENECK,), jnp.float32),
        "bn_gamma": jnp.ones((BOTTLENECK,), jnp.float32),
        "bn_beta": jnp.zeros((BOTTLENECK,), jnp.float32),
        "bn_mean": jnp.zeros((BOTTLENECK,), jnp.float32),
        "bn_var": jnp.ones((BOTTLENECK,), jnp.float32),
        "fc2_w": jax.random.normal(k2, (BOTTLENECK, class_num), jnp.float32) * 0.02,
    }


def prepare_params(params):
    """One-time (outside the forward): fold BN, cast weights to bf16, pad."""
    in_ch = params["conv_w"].shape[0]
    conv_w = (jnp.zeros((STEM_K_PAD, BACKBONE_CH), jnp.float32)
              .at[:in_ch].set(params["conv_w"])).astype(jnp.bfloat16)
    conv_b = params["conv_b"].reshape(1, BACKBONE_CH).astype(jnp.float32)

    scale = params["bn_gamma"] * lax.rsqrt(params["bn_var"] + BN_EPS)
    w1 = (params["fc1_w"] * scale[None, :]).astype(jnp.bfloat16)
    b1 = ((params["fc1_b"] - params["bn_mean"]) * scale
          + params["bn_beta"]).reshape(1, BOTTLENECK).astype(jnp.float32)

    class_num = params["fc2_w"].shape[1]
    n_pad = ((class_num + 127) // 128) * 128
    w2 = (jnp.zeros((BOTTLENECK, n_pad), jnp.float32)
          .at[:, :class_num].set(params["fc2_w"])).astype(jnp.bfloat16)

    return {"conv_w": conv_w, "conv_b": conv_b, "w1": w1, "b1": b1, "w2": w2}


# ----------------------------------------------------------------------------
# Model wrapper (glue in plain JAX; hot paths in the Pallas kernels above)
# ----------------------------------------------------------------------------
def _net_ibn_forward(prep, x_nchw):
    """Backbone stand-in + AFIM stand-in -> (B2, 4096) feature (eval mode)."""
    B2, C, H, W = x_nchw.shape
    hw = H * W
    xf = jnp.transpose(x_nchw, (0, 2, 3, 1)).reshape(B2 * hw, C)
    # Lane-dense, pre-padded bf16 input (zeros in padded channels; conv_w is
    # zero-padded the same way, so the dot is exact).
    x_pad = (jnp.zeros((B2 * hw, STEM_K_PAD), jnp.bfloat16)
             .at[:, :C].set(xf.astype(jnp.bfloat16)))
    pooled = pallas_stem_pool(x_pad, prep["conv_w"], prep["conv_b"],
                              n_batch=B2, hw=hw)        # (2*B2, 2048)
    # rows [b_avg, b_max] contiguous -> reshape == concat([avg, max], axis=1)
    return pooled.reshape(B2, FEAT_DIM)


def _classblock_forward(prep, f, class_num):
    """ClassBlock(4096, class_num, droprate=0.5, return_f=True), eval-mode BN.
    NOTE: bf16 MXU inputs -> ~1e-2 relative error vs fp32 reference."""
    M = f.shape[0]
    m_pad = ((M + 7) // 8) * 8
    f_pad = jnp.pad(f, ((0, m_pad - M), (0, 0)))
    logits_pad, h = pallas_classblock(f_pad, prep["w1"], prep["b1"], prep["w2"])
    # Dropout(p=0.5) is identity in eval; return_f=True -> (logits, feature)
    return logits_pad[:M, :class_num], h[:M]


def two_view_net_forward(prep, x1, x2, *, class_num, training=False):
    """share_weight=True: both views share the backbone, so they are batch-
    concatenated and processed in a single pass per kernel."""
    B = x1.shape[0]
    x = jnp.concatenate([x1, x2], axis=0)          # (2B, C, H, W)
    f = _net_ibn_forward(prep, x)                  # (2B, 4096)
    f1, f2 = f[:B], f[B:]
    if training:
        logits, feat = _classblock_forward(prep, f, class_num)
        return (logits[:B], feat[:B]), (logits[B:], feat[B:])
    # Eval mode: PyTorch computes the classifier and discards it; that dead
    # work would be DCE'd under jit anyway, so it is skipped and the returned
    # (f1, f2) match the PyTorch eval output.
    return f1, f2


# ----------------------------------------------------------------------------
if __name__ == "__main__":
    key = jax.random.PRNGKey(0)
    kp, kx1, kx2 = jax.random.split(key, 3)

    B, C, H, W = 2, 4, 16, 16
    CLASS_NUM = 8

    params = init_params(kp, C, CLASS_NUM)
    prep = prepare_params(params)          # one-time parameter prep (hoisted)
    x1 = jax.random.normal(kx1, (B, C, H, W), jnp.float32)
    x2 = jax.random.normal(kx2, (B, C, H, W), jnp.float32)

    # Eval path (matches the PyTorch module's eval return: the two features).
    eval_fwd = jax.jit(functools.partial(
        two_view_net_forward, class_num=CLASS_NUM, training=False))
    f1, f2 = eval_fwd(prep, x1, x2)
    jax.block_until_ready((f1, f2))
    assert f1.shape == (B, FEAT_DIM) and f2.shape == (B, FEAT_DIM)
    assert f1.dtype == jnp.float32 and f2.dtype == jnp.float32

    # Training path exercises the fused ClassBlock kernel as well.
    train_fwd = jax.jit(functools.partial(
        two_view_net_forward, class_num=CLASS_NUM, training=True))
    (y1_logits, y1_f), (y2_logits, y2_f) = train_fwd(prep, x1, x2)
    jax.block_until_ready((y1_logits, y1_f, y2_logits, y2_f))
    assert y1_logits.shape == (B, CLASS_NUM) and y1_f.shape == (B, BOTTLENECK)
    assert y2_logits.shape == (B, CLASS_NUM) and y2_f.shape == (B, BOTTLENECK)

    print("KERNEL_OK")
</pallas_src>

<mosaic_0001>
module attributes {stable_mosaic.version = 11 : i64} {
  func.func @_stem_pool_kernel(%arg0: i32, %arg1: memref<1024x128xbf16, #tpu.memory_space<vmem>>, %arg2: memref<128x512xbf16, #tpu.memory_space<vmem>>, %arg3: memref<1x512xf32, #tpu.memory_space<vmem>>, %arg4: memref<8x512xf32, #tpu.memory_space<vmem>>) attributes {dimension_semantics = [#tpu.dimension_semantics<parallel>], iteration_bounds = array<i64: 4>, scalar_prefetch = 0 : i64, scratch_operands = 0 : i64, tpu.core_type = #tpu.core_type<tc>, window_params = [{pipeline_mode = #tpu.pipeline_mode<synchronous>, transform_indices = @transform_0, window_bounds = array<i64: 1024, 128>}, {transform_indices = @transform_1, window_bounds = array<i64: 128, 512>}, {transform_indices = @transform_2, window_bounds = array<i64: 1, 512>}, {transform_indices = @transform_3, window_bounds = array<i64: 8, 512>}]} {
    %c0 = arith.constant 0 : index
    %c0_0 = arith.constant 0 : index
    %0 = vector.load %arg2[%c0, %c0_0] : memref<128x512xbf16, #tpu.memory_space<vmem>>, vector<128x512xbf16>
    %c0_1 = arith.constant 0 : index
    %c0_2 = arith.constant 0 : index
    %1 = vector.load %arg3[%c0_1, %c0_2] : memref<1x512xf32, #tpu.memory_space<vmem>>, vector<1x512xf32>
    %cst = arith.constant 0.000000e+00 : f32
    %2 = vector.broadcast %cst : f32 to vector<16x512xf32>
    %cst_3 = arith.constant 0.000000e+00 : f32
    %3 = vector.broadcast %cst_3 : f32 to vector<16x512xf32>
    %c0_i32 = arith.constant 0 : i32
    %c16_i32 = arith.constant 16 : i32
    %4 = arith.addi %c0_i32, %c16_i32 : i32
    %c1_i32 = arith.constant 1 : i32
    %5:2 = scf.for %arg5 = %c0_i32 to %4 step %c1_i32 iter_args(%arg6 = %2, %arg7 = %3) -> (vector<16x512xf32>, vector<16x512xf32>)  : i32 {
      %c16_i32_37 = arith.constant 16 : i32
      %44 = arith.muli %arg5, %c16_i32_37 : i32
      %c0_i32_38 = arith.constant 0 : i32
      %45 = arith.addi %c0_i32_38, %44 : i32
      %46 = tpu.assume_multiple %45, 16 : i32
      %47 = arith.index_cast %46 : i32 to index
      %c0_39 = arith.constant 0 : index
      %48 = vector.load %arg1[%47, %c0_39] : memref<1024x128xbf16, #tpu.memory_space<vmem>>, vector<16x128xbf16>
      %cst_40 = arith.constant dense<0.000000e+00> : vector<16x512xf32>
      %49 = tpu.matmul %48, %0, %cst_40 {dimension_numbers = #tpu.dot_dimension_numbers<[1], [0], [0], [1], [0, 0, 1, 1], [], []>} : vector<16x128xbf16>, vector<128x512xbf16>, vector<16x512xf32> -> vector<16x512xf32>
      %50 = vector.broadcast %1 : vector<1x512xf32> to vector<16x512xf32>
      %51 = arith.addf %49, %50 : vector<16x512xf32>
      %cst_41 = arith.constant 0.000000e+00 : f32
      %52 = vector.broadcast %cst_41 : f32 to vector<16x512xf32>
      %53 = arith.maximumf %51, %52 : vector<16x512xf32>
      %54 = arith.addf %arg6, %53 : vector<16x512xf32>
      %55 = arith.maximumf %arg7, %53 : vector<16x512xf32>
      scf.yield %54, %55 : vector<16x512xf32>, vector<16x512xf32>
    }
    %c16_i32_4 = arith.constant 16 : i32
    %cst_5 = arith.constant dense<0.000000e+00> : vector<512xf32>
    %6 = vector.multi_reduction <add>, %5#0, %cst_5 [0] : vector<16x512xf32> to vector<512xf32>
    %7 = vector.shape_cast %6 : vector<512xf32> to vector<1x512xf32>
    %cst_6 = arith.constant 3.906250e-03 : f32
    %8 = vector.broadcast %cst_6 : f32 to vector<1x512xf32>
    %9 = arith.mulf %7, %8 : vector<1x512xf32>
    %cst_7 = arith.constant dense<0xFF800000> : vector<512xf32>
    %10 = vector.multi_reduction <maximumf>, %5#1, %cst_7 [0] : vector<16x512xf32> to vector<512xf32>
    %11 = vector.shape_cast %10 : vector<512xf32> to vector<1x512xf32>
    %cst_8 = arith.constant 0.000000e+00 : f32
    %12 = vector.broadcast %cst_8 : f32 to vector<16x512xf32>
    %cst_9 = arith.constant 0.000000e+00 : f32
    %13 = vector.broadcast %cst_9 : f32 to vector<16x512xf32>
    %c0_i32_10 = arith.constant 0 : i32
    %c16_i32_11 = arith.constant 16 : i32
    %14 = arith.addi %c0_i32_10, %c16_i32_11 : i32
    %c1_i32_12 = arith.constant 1 : i32
    %15:2 = scf.for %arg5 = %c0_i32_10 to %14 step %c1_i32_12 iter_args(%arg6 = %12, %arg7 = %13) -> (vector<16x512xf32>, vector<16x512xf32>)  : i32 {
      %c16_i32_37 = arith.constant 16 : i32
      %44 = arith.muli %arg5, %c16_i32_37 : i32
      %c256_i32 = arith.constant 256 : i32
      %45 = arith.addi %c256_i32, %44 : i32
      %46 = tpu.assume_multiple %45, 16 : i32
      %47 = arith.index_cast %46 : i32 to index
      %c0_38 = arith.constant 0 : index
      %48 = vector.load %arg1[%47, %c0_38] : memref<1024x128xbf16, #tpu.memory_space<vmem>>, vector<16x128xbf16>
      %cst_39 = arith.constant dense<0.000000e+00> : vector<16x512xf32>
      %49 = tpu.matmul %48, %0, %cst_39 {dimension_numbers = #tpu.dot_dimension_numbers<[1], [0], [0], [1], [0, 0, 1, 1], [], []>} : vector<16x128xbf16>, vector<128x512xbf16>, vector<16x512xf32> -> vector<16x512xf32>
      %50 = vector.broadcast %1 : vector<1x512xf32> to vector<16x512xf32>
      %51 = arith.addf %49, %50 : vector<16x512xf32>
      %cst_40 = arith.constant 0.000000e+00 : f32
      %52 = vector.broadcast %cst_40 : f32 to vector<16x512xf32>
      %53 = arith.maximumf %51, %52 : vector<16x512xf32>
      %54 = arith.addf %arg6, %53 : vector<16x512xf32>
      %55 = arith.maximumf %arg7, %53 : vector<16x512xf32>
      scf.yield %54, %55 : vector<16x512xf32>, vector<16x512xf32>
    }
    %c16_i32_13 = arith.constant 16 : i32
    %cst_14 = arith.constant dense<0.000000e+00> : vector<512xf32>
    %16 = vector.multi_reduction <add>, %15#0, %cst_14 [0] : vector<16x512xf32> to vector<512xf32>
    %17 = vector.shape_cast %16 : vector<512xf32> to vector<1x512xf32>
    %cst_15 = arith.constant 3.906250e-03 : f32
    %18 = vector.broadcast %cst_15 : f32 to vector<1x512xf32>
    %19 = arith.mulf %17, %18 : vector<1x512xf32>
    %cst_16 = arith.constant dense<0xFF800000> : vector<512xf32>
    %20 = vector.multi_reduction <maximumf>, %15#1, %cst_16 [0] : vector<16x512xf32> to vector<512xf32>
    %21 = vector.shape_cast %20 : vector<512xf32> to vector<1x512xf32>
    %cst_17 = arith.constant 0.000000e+00 : f32
    %22 = vector.broadcast %cst_17 : f32 to vector<16x512xf32>
    %cst_18 = arith.constant 0.000000e+00 : f32
    %23 = vector.broadcast %cst_18 : f32 to vector<16x512xf32>
    %c0_i32_19 = arith.constant 0 : i32
    %c16_i32_20 = arith.constant 16 : i32
    %24 = arith.addi %c0_i32_19, %c16_i32_20 : i32
    %c1_i32_21 = arith.constant 1 : i32
    %25:2 = scf.for %arg5 = %c0_i32_19 to %24 step %c1_i32_21 iter_args(%arg6 = %22, %arg7 = %23) -> (vector<16x512xf32>, vector<16x512xf32>)  : i32 {
      %c16_i32_37 = arith.constant 16 : i32
      %44 = arith.muli %arg5, %c16_i32_37 : i32
      %c512_i32 = arith.constant 512 : i32
      %45 = arith.addi %c512_i32, %44 : i32
      %46 = tpu.assume_multiple %45, 16 : i32
      %47 = arith.index_cast %46 : i32 to index
      %c0_38 = arith.constant 0 : index
      %48 = vector.load %arg1[%47, %c0_38] : memref<1024x128xbf16, #tpu.memory_space<vmem>>, vector<16x128xbf16>
      %cst_39 = arith.constant dense<0.000000e+00> : vector<16x512xf32>
      %49 = tpu.matmul %48, %0, %cst_39 {dimension_numbers = #tpu.dot_dimension_numbers<[1], [0], [0], [1], [0, 0, 1, 1], [], []>} : vector<16x128xbf16>, vector<128x512xbf16>, vector<16x512xf32> -> vector<16x512xf32>
      %50 = vector.broadcast %1 : vector<1x512xf32> to vector<16x512xf32>
      %51 = arith.addf %49, %50 : vector<16x512xf32>
      %cst_40 = arith.constant 0.000000e+00 : f32
      %52 = vector.broadcast %cst_40 : f32 to vector<16x512xf32>
      %53 = arith.maximumf %51, %52 : vector<16x512xf32>
      %54 = arith.addf %arg6, %53 : vector<16x512xf32>
      %55 = arith.maximumf %arg7, %53 : vector<16x512xf32>
      scf.yield %54, %55 : vector<16x512xf32>, vector<16x512xf32>
    }
    %c16_i32_22 = arith.constant 16 : i32
    %cst_23 = arith.constant dense<0.000000e+00> : vector<512xf32>
    %26 = vector.multi_reduction <add>, %25#0, %cst_23 [0] : vector<16x512xf32> to vector<512xf32>
    %27 = vector.shape_cast %26 : vector<512xf32> to vector<1x512xf32>
    %cst_24 = arith.constant 3.906250e-03 : f32
    %28 = vector.broadcast %cst_24 : f32 to vector<1x512xf32>
    %29 = arith.mulf %27, %28 : vector<1x512xf32>
    %cst_25 = arith.constant dense<0xFF800000> : vector<512xf32>
    %30 = vector.multi_reduction <maximumf>, %25#1, %cst_25 [0] : vector<16x512xf32> to vector<512xf32>
    %31 = vector.shape_cast %30 : vector<512xf32> to vector<1x512xf32>
    %cst_26 = arith.constant 0.000000e+00 : f32
    %32 = vector.broadcast %cst_26 : f32 to vector<16x512xf32>
    %cst_27 = arith.constant 0.000000e+00 : f32
    %33 = vector.broadcast %cst_27 : f32 to vector<16x512xf32>
    %c0_i32_28 = arith.constant 0 : i32
    %c16_i32_29 = arith.constant 16 : i32
    %34 = arith.addi %c0_i32_28, %c16_i32_29 : i32
    %c1_i32_30 = arith.constant 1 : i32
    %35:2 = scf.for %arg5 = %c0_i32_28 to %34 step %c1_i32_30 iter_args(%arg6 = %32, %arg7 = %33) -> (vector<16x512xf32>, vector<16x512xf32>)  : i32 {
      %c16_i32_37 = arith.constant 16 : i32
      %44 = arith.muli %arg5, %c16_i32_37 : i32
      %c768_i32 = arith.constant 768 : i32
      %45 = arith.addi %c768_i32, %44 : i32
      %46 = tpu.assume_multiple %45, 16 : i32
      %47 = arith.index_cast %46 : i32 to index
      %c0_38 = arith.constant 0 : index
      %48 = vector.load %arg1[%47, %c0_38] : memref<1024x128xbf16, #tpu.memory_space<vmem>>, vector<16x128xbf16>
      %cst_39 = arith.constant dense<0.000000e+00> : vector<16x512xf32>
      %49 = tpu.matmul %48, %0, %cst_39 {dimension_numbers = #tpu.dot_dimension_numbers<[1], [0], [0], [1], [0, 0, 1, 1], [], []>} : vector<16x128xbf16>, vector<128x512xbf16>, vector<16x512xf32> -> vector<16x512xf32>
      %50 = vector.broadcast %1 : vector<1x512xf32> to vector<16x512xf32>
      %51 = arith.addf %49, %50 : vector<16x512xf32>
      %cst_40 = arith.constant 0.000000e+00 : f32
      %52 = vector.broadcast %cst_40 : f32 to vector<16x512xf32>
      %53 = arith.maximumf %51, %52 : vector<16x512xf32>
      %54 = arith.addf %arg6, %53 : vector<16x512xf32>
      %55 = arith.maximumf %arg7, %53 : vector<16x512xf32>
      scf.yield %54, %55 : vector<16x512xf32>, vector<16x512xf32>
    }
    %c16_i32_31 = arith.constant 16 : i32
    %cst_32 = arith.constant dense<0.000000e+00> : vector<512xf32>
    %36 = vector.multi_reduction <add>, %35#0, %cst_32 [0] : vector<16x512xf32> to vector<512xf32>
    %37 = vector.shape_cast %36 : vector<512xf32> to vector<1x512xf32>
    %cst_33 = arith.constant 3.906250e-03 : f32
    %38 = vector.broadcast %cst_33 : f32 to vector<1x512xf32>
    %39 = arith.mulf %37, %38 : vector<1x512xf32>
    %cst_34 = arith.constant dense<0xFF800000> : vector<512xf32>
    %40 = vector.multi_reduction <maximumf>, %35#1, %cst_34 [0] : vector<16x512xf32> to vector<512xf32>
    %41 = vector.shape_cast %40 : vector<512xf32> to vector<1x512xf32>
    %42 = tpu.concatenate %9, %11, %19, %21, %29, %31, %39, %41 in 0 : vector<1x512xf32>, vector<1x512xf32>, vector<1x512xf32>, vector<1x512xf32>, vector<1x512xf32>, vector<1x512xf32>, vector<1x512xf32>, vector<1x512xf32> -> vector<8x512xf32>
    %c0_35 = arith.constant 0 : index
    %c0_36 = arith.constant 0 : index
    %43 = vector.load %arg4[%c0_35, %c0_36] : memref<8x512xf32, #tpu.memory_space<vmem>>, vector<8x512xf32>
    tpu.vector_store %arg4[%c0_35, %c0_36], %42 {strides = array<i32>} : memref<8x512xf32, #tpu.memory_space<vmem>>, vector<8x512xf32>,
    return
  }
  func.func @transform_0(%arg0: i32) -> (i32, i32) {
    %c0_i32 = arith.constant 0 : i32
    %c0_i32_0 = arith.constant 0 : i32
    %c0_i32_1 = arith.constant 0 : i32
    return %c0_i32, %c0_i32_0 : i32, i32
  }
  func.func @transform_1(%arg0: i32) -> (i32, i32) {
    %c0_i32 = arith.constant 0 : i32
    %c0_i32_0 = arith.constant 0 : i32
    return %c0_i32, %arg0 : i32, i32
  }
  func.func @transform_2(%arg0: i32) -> (i32, i32) {
    %c0_i32 = arith.constant 0 : i32
    %c0_i32_0 = arith.constant 0 : i32
    return %c0_i32, %arg0 : i32, i32
  }
  func.func @transform_3(%arg0: i32) -> (i32, i32) {
    %c0_i32 = arith.constant 0 : i32
    %c0_i32_0 = arith.constant 0 : i32
    return %c0_i32, %arg0 : i32, i32
  }
}

</mosaic_0001>

<llo_original>
// kernel: two_view_net_forward.1
$region0: #{two_view_net_forward.1}
  #allocation0 [shape = 'u32[]', space=smem, size = 0x4, offset = 0x4, fixed_abs, tag = 'smem constant byte address 0x4 - core index']
  #allocation1 [shape = 'u32[144,128]{1,0:T(1,128)}', space=vmem, size = 0x12000, scoped, tag = 'internal scratch']
  %s0 = inlined_call_operand.vmem [shape: bf16[1024,128], index: 0, kind: input, shape index: {}]
  %s1 = inlined_call_operand.vmem [shape: bf16[128,2048], index: 1, kind: input, shape index: {}]
  %s2 = inlined_call_operand.vmem [shape: f32[1,2048], index: 2, kind: input, shape index: {}]
  %s3 = inlined_call_operand.vmem [shape: f32[8,2048], index: 3, kind: output, shape index: {}]
  %s4 = sld [smem:[#allocation0]]
  $region96: #{two_view_net_forward.1} parent=0
    _
  %s6 = ssub.s32 1, %s4
  %s7 = scalar_select 0, %s6, %s4
  $region1: #{two_view_net_forward.1} parent=0
    #allocation2 [shape = 'u8[262144]{0}', space=vmem, size = 0x40000, scoped, tag = 'input window, operand 1']
    loop: start=0, step=1, limit=6
    $region2: #{two_view_net_forward.1} parent=1 // loop_pre_header
      _
    $region3: #{two_view_net_forward.1} parent=1 // loop_header
      %s9 = sphi 0, %s13
      %p10 = scmp.ge.s32.totalorder %s9, 6
      %s17 = sphi 0, %s17
      %s19 = sphi 0, %s17
      %s20 = sphi 0, %s19
      %s34 = sphi 0, %s20
      %s40 = sphi 0, %s42
      %s43 = sphi 0, %s40
      %s44 = sphi 0, %s43
      %s60 = sphi 0, %s44
      %s66 = sphi 0, %s68
      %s69 = sphi 0, %s66
      %s70 = sphi 0, %s69
      %s86 = sphi 0, %s70
      %s92 = sphi 0, %s94
      %s95 = sphi 0, %s92
      %s96 = sphi 0, %s95
      %s112 = sphi 0, %s96
    $region4: #{two_view_net_forward.1} parent=1 // loop_header_branch
      %12 = sbr.rel (%p10) target = $region8
    $region5: #{two_view_net_forward.1} parent=1 // loop_body
      %s14 = ssub.s32 %s9, 1
      %s15 = ssub.s32 %s9, 2
      %s16 = sadd.s32 %s9, 1
      %s18 = sadd.s32 %s17, 1
      %p21 = scmp.eq.s32.totalorder %s9, 3
      %p22 = scmp.ne.s32.totalorder %s17, %s19
      %p23 = scmp.eq.s32.totalorder %s9, 0
      %p24 = por %p22, %p23
      %p25 = scmp.ne.s32.totalorder %s17, %s19
      %p26 = scmp.eq.s32.totalorder %s14, 3
      %p27 = por %p25, %p26
      %p28 = scmp.ne.s32.totalorder %s19, %s20
      %p29 = scmp.eq.s32.totalorder %s14, 0
      %p30 = por %p28, %p29
      %p31 = scmp.ne.s32.totalorder %s19, %s20
      %p32 = scmp.eq.s32.totalorder %s15, 3
      %p33 = por %p31, %p32
      %p35 = scmp.ne.s32.totalorder %s20, %s34
      %p36 = scmp.eq.s32.totalorder %s15, 0
      %p37 = por %p35, %p36
      %s38 = ssub.s32 %s9, %s16
      %p39 = scmp.eq.s32.totalorder %s38, 0
      %s41 = sadd.s32 %s40, 1
      %s42 = scalar_select %p39, %s40, %s41
      %p45 = pneg %p39
      %p46 = scmp.eq.s32.totalorder %s9, 3
      %p47 = por %p45, %p46
      %p48 = scmp.ne.s32.totalorder %s40, %s43
      %p49 = scmp.eq.s32.totalorder %s9, 0
      %p50 = por %p48, %p49
      %p51 = scmp.ne.s32.totalorder %s40, %s43
      %p52 = scmp.eq.s32.totalorder %s14, 3
      %p53 = por %p51, %p52
      %p54 = scmp.ne.s32.totalorder %s43, %s44
      %p55 = scmp.eq.s32.totalorder %s14, 0
      %p56 = por %p54, %p55
      %p57 = scmp.ne.s32.totalorder %s43, %s44
      %p58 = scmp.eq.s32.totalorder %s15, 3
      %p59 = por %p57, %p58
      %p61 = scmp.ne.s32.totalorder %s44, %s60
      %p62 = scmp.eq.s32.totalorder %s15, 0
      %p63 = por %p61, %p62
      %s64 = ssub.s32 %s9, %s16
      %p65 = scmp.eq.s32.totalorder %s64, 0
      %s67 = sadd.s32 %s66, 1
      %s68 = scalar_select %p65, %s66, %s67
      %p71 = pneg %p65
      %p72 = scmp.eq.s32.totalorder %s9, 3
      %p73 = por %p71, %p72
      %p74 = scmp.ne.s32.totalorder %s66, %s69
      %p75 = scmp.eq.s32.totalorder %s9, 0
      %p76 = por %p74, %p75
      %p77 = scmp.ne.s32.totalorder %s66, %s69
      %p78 = scmp.eq.s32.totalorder %s14, 3
      %p79 = por %p77, %p78
      %p80 = scmp.ne.s32.totalorder %s69, %s70
      %p81 = scmp.eq.s32.totalorder %s14, 0
      %p82 = por %p80, %p81
      %p83 = scmp.ne.s32.totalorder %s69, %s70
      %p84 = scmp.eq.s32.totalorder %s15, 3
      %p85 = por %p83, %p84
      %p87 = scmp.ne.s32.totalorder %s70, %s86
      %p88 = scmp.eq.s32.totalorder %s15, 0
      %p89 = por %p87, %p88
      %s90 = ssub.s32 %s9, %s16
      %p91 = scmp.eq.s32.totalorder %s90, 0
      %s93 = sadd.s32 %s92, 1
      %s94 = scalar_select %p91, %s92, %s93
      %p97 = pneg %p91
      %p98 = scmp.eq.s32.totalorder %s9, 3
      %p99 = por %p97, %p98
      %p100 = scmp.ne.s32.totalorder %s92, %s95
      %p101 = scmp.eq.s32.totalorder %s9, 0
      %p102 = por %p100, %p101
      %p103 = scmp.ne.s32.totalorder %s92, %s95
      %p104 = scmp.eq.s32.totalorder %s14, 3
      %p105 = por %p103, %p104
      %p106 = scmp.ne.s32.totalorder %s95, %s96
      %p107 = scmp.eq.s32.totalorder %s14, 0
      %p108 = por %p106, %p107
      %p109 = scmp.ne.s32.totalorder %s95, %s96
      %p110 = scmp.eq.s32.totalorder %s15, 3
      %p111 = por %p109, %p110
      %p113 = scmp.ne.s32.totalorder %s96, %s112
      %p114 = scmp.eq.s32.totalorder %s15, 0
      %p115 = por %p113, %p114
      %p116 = scmp.le.s32.totalorder 1, %s9
      %p117 = scmp.lt.s32.totalorder %s9, 5
      %p118 = pnand %p116, %p117
      %p119 = pneg %p118
      // Predicated region
      $region9: #{two_view_net_forward.1} parent=5 // pred_check
        _
      $region10: #{two_view_net_forward.1} parent=5 // pred_check_branch
        %121 = sbr.rel (%p118) target = $region12
      $region11: #{two_view_net_forward.1} parent=5 // pred_region
        %s122 = ssub.s32 %s9, 1
        // Predicated region
        $region13: #{two_view_net_forward.1} parent=11 // pred_check
          %p123 = pneg %p30
        $region14: #{two_view_net_forward.1} parent=11 // pred_check_branch
          %125 = sbr.rel (%p123) target = $region16
        $region15: #{two_view_net_forward.1} parent=11 // pred_region
          _
        $region16: #{two_view_net_forward.1} parent=11 // pred_fallthru
          _
      $region12: #{two_view_net_forward.1} parent=5 // pred_fallthru
        _
      %p126 = scmp.lt.s32.totalorder %s9, 4
      // Predicated region
      $region17: #{two_view_net_forward.1} parent=5 // pred_check
        %p127 = pneg %p126
      $region18: #{two_view_net_forward.1} parent=5 // pred_check_branch
        %129 = sbr.rel (%p127) target = $region20
      $region19: #{two_view_net_forward.1} parent=5 // pred_region
        // Predicated region
        $region21: #{two_view_net_forward.1} parent=19 // pred_check
          %p130 = pneg %p50
        $region22: #{two_view_net_forward.1} parent=19 // pred_check_branch
          %132 = sbr.rel (%p130) target = $region24
        $region23: #{two_view_net_forward.1} parent=19 // pred_region
          %s133 = sand.u32 %s40, 1
          %s134 = sand.u32 %s40, 1
          %s135 = smul.addr %s134, 256
          %s136 = scalar_lea.vmem [#allocation2], %s135
          %s137 = smul.u32 4, %s9
          %s138 = smul.addr %s137, 4
          %s139 = scalar_lea.vmem %s1, %s138
          // Predicated region
          $region25: #{two_view_net_forward.1} parent=23 // pred_check
            _
          $region26: #{two_view_net_forward.1} parent=23 // pred_check_branch
            %141 = sbr.rel (0) target = $region28
          $region27: #{two_view_net_forward.1} parent=23 // pred_region
            // Predicated region
            $region29: #{two_view_net_forward.1} parent=27 // pred_check
              _
            $region30: #{two_view_net_forward.1} parent=27 // pred_check_branch
              %143 = sbr.rel (0) target = $region32
            $region31: #{two_view_net_forward.1} parent=27 // pred_region
              loop: start=0, step=1, limit=1
              $region33: #{two_view_net_forward.1} parent=31 // loop_pre_header
                _
              $region34: #{two_view_net_forward.1} parent=31 // loop_header
                %s145 = sphi 0, %s149
                %p146 = scmp.ge.s32.totalorder %s145, 1
                %s150 = sphi %s139, %s139
                %s151 = sphi %s136, %s136
              $region35: #{two_view_net_forward.1} parent=31 // loop_header_branch
                %148 = sbr.rel (%p146) target = $region39
              $region36: #{two_view_net_forward.1} parent=31 // loop_body
                %v152 = vld [vmem:[%s150] sm:$0xff]
                %153 = vst [vmem:[%s151] sm:$0xff] %v152
                %v154 = vld [vmem:[%s150 + $0x8] sm:$0xff]
                %155 = vst [vmem:[%s151 + $0x8] sm:$0xff] %v154
                %v156 = vld [vmem:[%s150 + $0x40] sm:$0xff]
                %157 = vst [vmem:[%s151 + $0x10] sm:$0xff] %v156
                %v158 = vld [vmem:[%s150 + $0x48] sm:$0xff]
                %159 = vst [vmem:[%s151 + $0x18] sm:$0xff] %v158
                %v160 = vld [vmem:[%s150 + $0x80] sm:$0xff]
                %161 = vst [vmem:[%s151 + $0x20] sm:$0xff] %v160
                %v162 = vld [vmem:[%s150 + $0x88] sm:$0xff]
                %163 = vst [vmem:[%s151 + $0x28] sm:$0xff] %v162
                %v164 = vld [vmem:[%s150 + $0xc0] sm:$0xff]
                %165 = vst [vmem:[%s151 + $0x30] sm:$0xff] %v164
                %v166 = vld [vmem:[%s150 + $0xc8] sm:$0xff]
                %167 = vst [vmem:[%s151 + $0x38] sm:$0xff] %v166
                %v168 = vld [vmem:[%s150 + $0x100] sm:$0xff]
                %169 = vst [vmem:[%s151 + $0x40] sm:$0xff] %v168
                %v170 = vld [vmem:[%s150 + $0x108] sm:$0xff]
                %171 = vst [vmem:[%s151 + $0x48] sm:$0xff] %v170
                %v172 = vld [vmem:[%s150 + $0x140] sm:$0xff]
                %173 = vst [vmem:[%s151 + $0x50] sm:$0xff] %v172
                %v174 = vld [vmem:[%s150 + $0x148] sm:$0xff]
                %175 = vst [vmem:[%s151 + $0x58] sm:$0xff] %v174
                %v176 = vld [vmem:[%s150 + $0x180] sm:$0xff]
                %177 = vst [vmem:[%s151 + $0x60] sm:$0xff] %v176
                %v178 = vld [vmem:[%s150 + $0x188] sm:$0xff]
                %179 = vst [vmem:[%s151 + $0x68] sm:$0xff] %v178
                %v180 = vld [vmem:[%s150 + $0x1c0] sm:$0xff]
                %181 = vst [vmem:[%s151 + $0x70] sm:$0xff] %v180
                %v182 = vld [vmem:[%s150 + $0x1c8] sm:$0xff]
                %183 = vst [vmem:[%s151 + $0x78] sm:$0xff] %v182
                %v184 = vld [vmem:[%s150 + $0x200] sm:$0xff]
                %185 = vst [vmem:[%s151 + $0x80] sm:$0xff] %v184
                %v186 = vld [vmem:[%s150 + $0x208] sm:$0xff]
                %187 = vst [vmem:[%s151 + $0x88] sm:$0xff] %v186
                %v188 = vld [vmem:[%s150 + $0x240] sm:$0xff]
                %189 = vst [vmem:[%s151 + $0x90] sm:$0xff] %v188
                %v190 = vld [vmem:[%s150 + $0x248] sm:$0xff]
                %191 = vst [vmem:[%s151 + $0x98] sm:$0xff] %v190
                %v192 = vld [vmem:[%s150 + $0x280] sm:$0xff]
                %193 = vst [vmem:[%s151 + $0xa0] sm:$0xff] %v192
                %v194 = vld [vmem:[%s150 + $0x288] sm:$0xff]
                %195 = vst [vmem:[%s151 + $0xa8] sm:$0xff] %v194
                %v196 = vld [vmem:[%s150 + $0x2c0] sm:$0xff]
                %197 = vst [vmem:[%s151 + $0xb0] sm:$0xff] %v196
                %v198 = vld [vmem:[%s150 + $0x2c8] sm:$0xff]
                %199 = vst [vmem:[%s151 + $0xb8] sm:$0xff] %v198
                %v200 = vld [vmem:[%s150 + $0x300] sm:$0xff]
                %201 = vst [vmem:[%s151 + $0xc0] sm:$0xff] %v200
                %v202 = vld [vmem:[%s150 + $0x308] sm:$0xff]
                %203 = vst [vmem:[%s151 + $0xc8] sm:$0xff] %v202
                %v204 = vld [vmem:[%s150 + $0x340] sm:$0xff]
                %205 = vst [vmem:[%s151 + $0xd0] sm:$0xff] %v204
                %v206 = vld [vmem:[%s150 + $0x348] sm:$0xff]
                %207 = vst [vmem:[%s151 + $0xd8] sm:$0xff] %v206
                %v208 = vld [vmem:[%s150 + $0x380] sm:$0xff]
                %209 = vst [vmem:[%s151 + $0xe0] sm:$0xff] %v208
                %v210 = vld [vmem:[%s150 + $0x388] sm:$0xff]
                %211 = vst [vmem:[%s151 + $0xe8] sm:$0xff] %v210
                %v212 = vld [vmem:[%s150 + $0x3c0] sm:$0xff]
                %213 = vst [vmem:[%s151 + $0xf0] sm:$0xff] %v212
                %v214 = vld [vmem:[%s150 + $0x3c8] sm:$0xff]
                %215 = vst [vmem:[%s151 + $0xf8] sm:$0xff] %v214
              $region37: #{two_view_net_forward.1} parent=31 // loop_footer
                %s149 = sadd.s32 1, %s145
              $region38: #{two_view_net_forward.1} parent=31 // loop_footer_branch
                %144 = sbr.rel target = $region34
              $region39: #{two_view_net_forward.1} parent=31 // loop_exit
                _
            $region32: #{two_view_net_forward.1} parent=27 // pred_fallthru
              _
            // Predicated region
            $region40: #{two_view_net_forward.1} parent=27 // pred_check
              _
            $region41: #{two_view_net_forward.1} parent=27 // pred_check_branch
              %217 = sbr.rel target = $region43
            $region42: #{two_view_net_forward.1} parent=27 // pred_region
              _
            $region43: #{two_view_net_forward.1} parent=27 // pred_fallthru
              _
          $region28: #{two_view_net_forward.1} parent=23 // pred_fallthru
            _
          %218 = vnop
        $region24: #{two_view_net_forward.1} parent=19 // pred_fallthru
          _
        // Predicated region
        $region44: #{two_view_net_forward.1} parent=19 // pred_check
          %p219 = pneg %p76
        $region45: #{two_view_net_forward.1} parent=19 // pred_check_branch
          %221 = sbr.rel (%p219) target = $region47
        $region46: #{two_view_net_forward.1} parent=19 // pred_region
          %s222 = smul.u32 4, %s9
          %p223 = scmp.lt.s32.totalorder %s222, 15
          %s224 = scalar_select %p223, %s222, 15
          %s225 = scalar_lea.vmem %s2, %s224
          %s226 = smul.u32 4, %s9
        $region47: #{two_view_net_forward.1} parent=19 // pred_fallthru
          _
      $region20: #{two_view_net_forward.1} parent=5 // pred_fallthru
        _
      %p227 = scmp.le.s32.totalorder 1, %s9
      %p228 = scmp.lt.s32.totalorder %s9, 5
      %p229 = pnand %p227, %p228
      %p230 = pneg %p229
      // Predicated region
      $region48: #{two_view_net_forward.1} parent=5 // pred_check
        _
      $region49: #{two_view_net_forward.1} parent=5 // pred_check_branch
        %232 = sbr.rel (%p229) target = $region51
      $region50: #{two_view_net_forward.1} parent=5 // pred_region
        %s233 = ssub.s32 %s9, 1
        %s234 = sand.u32 %s43, 1
        %s235 = sand.u32 %s43, 1
        %s236 = smul.addr %s235, 256
        %s237 = scalar_lea.vmem [#allocation2], %s236
        // Predicated region
        $region52: #{two_view_net_forward.1} parent=50 // pred_check
          %p238 = pneg %p56
        $region53: #{two_view_net_forward.1} parent=50 // pred_check_branch
          %240 = sbr.rel (%p238) target = $region55
        $region54: #{two_view_net_forward.1} parent=50 // pred_region
          _
        $region55: #{two_view_net_forward.1} parent=50 // pred_fallthru
          _
        %p241 = pneg %p30
        %p242 = pneg %p27
        %s243 = sand.u32 %s43, 1
        %s244 = sand.u32 %s43, 1
        %s245 = smul.addr %s244, 256
        %s246 = scalar_lea.vmem [#allocation2], %s245
        %p247 = pneg %p56
        %p248 = pneg %p53
        %s249 = smul.u32 4, %s14
        %p250 = scmp.lt.s32.totalorder %s249, 15
        %s251 = scalar_select %p250, %s249, 15
        %s252 = scalar_lea.vmem %s2, %s251
        %p253 = pneg %p82
        %p254 = pneg %p79
        %p255 = pneg %p108
        %p256 = pneg %p105
        %s257 = smul.u32 4, %s14
        %p258 = scmp.lt.s32.totalorder %s257, 15
        %s259 = scalar_select %p258, %s257, 15
        %s260 = smul.addr %s259, 8
        %s261 = scalar_lea.vmem %s3, %s260
        %s262 = smul.u32 4, %s14
        %s263 = smul.u32 4, %s14
        %p264 = scmp.lt.s32.totalorder %s263, 15
        %s265 = scalar_select %p264, %s263, 15
        %s266 = scalar_lea.vmem %s2, %s265
        %s267 = smul.u32 4, %s14
        %s268 = smul.u32 4, %s14
        %p269 = scmp.lt.s32.totalorder %s268, 15
        %s270 = scalar_select %p269, %s268, 15
        %s271 = smul.addr %s270, 8
        %s272 = scalar_lea.vmem %s3, %s271
        %s273 = smul.u32 4, %s14
        %v275 = vld [vmem:[%s237] sm:$0xff]
        %v276 = vld [vmem:[%s237 + $0x8] sm:$0xff]
        %v277 = vld [vmem:[%s237 + $0x10] sm:$0xff]
        %v278 = vld [vmem:[%s237 + $0x18] sm:$0xff]
        %v279 = vld [vmem:[%s237 + $0x20] sm:$0xff]
        %v280 = vld [vmem:[%s237 + $0x28] sm:$0xff]
        %v281 = vld [vmem:[%s237 + $0x30] sm:$0xff]
        %v282 = vld [vmem:[%s237 + $0x38] sm:$0xff]
        %v283 = vld [vmem:[%s237 + $0x40] sm:$0xff]
        %v284 = vld [vmem:[%s237 + $0x48] sm:$0xff]
        %v285 = vld [vmem:[%s237 + $0x50] sm:$0xff]
        %v286 = vld [vmem:[%s237 + $0x58] sm:$0xff]
        %v287 = vld [vmem:[%s237 + $0x60] sm:$0xff]
        %v288 = vld [vmem:[%s237 + $0x68] sm:$0xff]
        %v289 = vld [vmem:[%s237 + $0x70] sm:$0xff]
        %v290 = vld [vmem:[%s237 + $0x78] sm:$0xff]
        %v291 = vld [vmem:[%s237 + $0x80] sm:$0xff]
        %v292 = vld [vmem:[%s237 + $0x88] sm:$0xff]
        %v293 = vld [vmem:[%s237 + $0x90] sm:$0xff]
        %v294 = vld [vmem:[%s237 + $0x98] sm:$0xff]
        %v295 = vld [vmem:[%s237 + $0xa0] sm:$0xff]
        %v296 = vld [vmem:[%s237 + $0xa8] sm:$0xff]
        %v297 = vld [vmem:[%s237 + $0xb0] sm:$0xff]
        %v298 = vld [vmem:[%s237 + $0xb8] sm:$0xff]
        %v299 = vld [vmem:[%s237 + $0xc0] sm:$0xff]
        %v300 = vld [vmem:[%s237 + $0xc8] sm:$0xff]
        %v301 = vld [vmem:[%s237 + $0xd0] sm:$0xff]
        %v302 = vld [vmem:[%s237 + $0xd8] sm:$0xff]
        %v303 = vld [vmem:[%s237 + $0xe0] sm:$0xff]
        %v304 = vld [vmem:[%s237 + $0xe8] sm:$0xff]
        %v305 = vld [vmem:[%s237 + $0xf0] sm:$0xff]
        %v306 = vld [vmem:[%s237 + $0xf8] sm:$0xff]
        %v307 = vld [vmem:[%s266] sm:$0xf]
        loop: start=0, step=1, limit=16
        $region56: #{two_view_net_forward.1} parent=50 // loop_pre_header
          _
        $region57: #{two_view_net_forward.1} parent=50 // loop_header
          %s309 = sphi 0, %s313
          %p310 = scmp.ge.s32.totalorder %s309, 16
          %v314 = vphi 0.0, %v618
          %v315 = vphi 0.0, %v619
          %v316 = vphi 0.0, %v620
          %v317 = vphi 0.0, %v621
          %v318 = vphi 0.0, %v622
          %v319 = vphi 0.0, %v623
          %v320 = vphi 0.0, %v624
          %v321 = vphi 0.0, %v625
          %v322 = vphi 0.0, %v626
          %v323 = vphi 0.0, %v627
          %v324 = vphi 0.0, %v628
          %v325 = vphi 0.0, %v629
          %v326 = vphi 0.0, %v630
          %v327 = vphi 0.0, %v631
          %v328 = vphi 0.0, %v632
          %v329 = vphi 0.0, %v633
        $region58: #{two_view_net_forward.1} parent=50 // loop_header_branch
          %312 = sbr.rel (%p310) target = $region62
        $region59: #{two_view_net_forward.1} parent=50 // loop_body
          %s330 = smul.u32 %s309, 16
          %s331 = sshra.s32 %s330, 3
          %s332 = sand.u32 %s330, 7
          %s333 = smul.addr %s331, 4
          %s334 = scalar_lea.vmem %s0, %s333
          %v335 = vld [vmem:[%s334] sm:$0xf]
          %v336 = vld [vmem:[%s334 + $0x4] sm:$0xf]
          %v338 = vlaneseq
          %v339 = vshrl.u32 %v338, 7
          %v340 = vsub.s32 0, %v339
          %v341 = vrot.slane %v307, %v340
          %v342 = vlaneseq
          %v343 = vshrl.u32 %v342, 7
          %v344 = vsub.s32 1, %v343
          %v345 = vrot.slane %v307, %v344
          %v346 = vlaneseq
          %v347 = vshrl.u32 %v346, 7
          %v348 = vsub.s32 2, %v347
          %v349 = vrot.slane %v307, %v348
          %v350 = vlaneseq
          %v351 = vshrl.u32 %v350, 7
          %v352 = vsub.s32 3, %v351
          %v353 = vrot.slane %v307, %v352
          %v360 = vunpack.c.l.b16 %v335
          %v361 = vunpack.c.l.b16 %v336
          %v362 = vpack.c.b16 %v361, %v360
          %v396 = vunpack.c.l.b16 %v275
          %v397 = vunpack.c.h.b16 %v275
          %v398 = vunpack.c.l.b16 %v276
          %v399 = vunpack.c.h.b16 %v276
          %v400 = vunpack.c.l.b16 %v277
          %v401 = vunpack.c.h.b16 %v277
          %v402 = vunpack.c.l.b16 %v278
          %v403 = vunpack.c.h.b16 %v278
          %v404 = vunpack.c.l.b16 %v279
          %v405 = vunpack.c.h.b16 %v279
          %v406 = vunpack.c.l.b16 %v280
          %v407 = vunpack.c.h.b16 %v280
          %v408 = vunpack.c.l.b16 %v281
          %v409 = vunpack.c.h.b16 %v281
          %v410 = vunpack.c.l.b16 %v282
          %v411 = vunpack.c.h.b16 %v282
          %v412 = vunpack.c.l.b16 %v283
          %v413 = vunpack.c.h.b16 %v283
          %v414 = vunpack.c.l.b16 %v284
          %v415 = vunpack.c.h.b16 %v284
          %v416 = vunpack.c.l.b16 %v285
          %v417 = vunpack.c.h.b16 %v285
          %v418 = vunpack.c.l.b16 %v286
          %v419 = vunpack.c.h.b16 %v286
          %v420 = vunpack.c.l.b16 %v287
          %v421 = vunpack.c.h.b16 %v287
          %v422 = vunpack.c.l.b16 %v288
          %v423 = vunpack.c.h.b16 %v288
          %v424 = vunpack.c.l.b16 %v289
          %v425 = vunpack.c.h.b16 %v289
          %v426 = vunpack.c.l.b16 %v290
          %v427 = vunpack.c.h.b16 %v290
          %v428 = vunpack.c.l.b16 %v291
          %v429 = vunpack.c.h.b16 %v291
          %v430 = vunpack.c.l.b16 %v292
          %v431 = vunpack.c.h.b16 %v292
          %v432 = vunpack.c.l.b16 %v293
          %v433 = vunpack.c.h.b16 %v293
          %v434 = vunpack.c.l.b16 %v294
          %v435 = vunpack.c.h.b16 %v294
          %v436 = vunpack.c.l.b16 %v295
          %v437 = vunpack.c.h.b16 %v295
          %v438 = vunpack.c.l.b16 %v296
          %v439 = vunpack.c.h.b16 %v296
          %v440 = vunpack.c.l.b16 %v297
          %v441 = vunpack.c.h.b16 %v297
          %v442 = vunpack.c.l.b16 %v298
          %v443 = vunpack.c.h.b16 %v298
          %v444 = vunpack.c.l.b16 %v299
          %v445 = vunpack.c.h.b16 %v299
          %v446 = vunpack.c.l.b16 %v300
          %v447 = vunpack.c.h.b16 %v300
          %v448 = vunpack.c.l.b16 %v301
          %v449 = vunpack.c.h.b16 %v301
          %v450 = vunpack.c.l.b16 %v302
          %v451 = vunpack.c.h.b16 %v302
          %v452 = vunpack.c.l.b16 %v303
          %v453 = vunpack.c.h.b16 %v303
          %v454 = vunpack.c.l.b16 %v304
          %v455 = vunpack.c.h.b16 %v304
          %v456 = vunpack.c.l.b16 %v305
          %v457 = vunpack.c.h.b16 %v305
          %v458 = vunpack.c.l.b16 %v306
          %v459 = vunpack.c.h.b16 %v306
          %v460 = vpack.c.b16 %v400, %v396
          %v461 = vpack.c.b16 %v401, %v397
          %v462 = vpack.c.b16 %v402, %v398
          %v463 = vpack.c.b16 %v403, %v399
          %v464 = vpack.c.b16 %v408, %v404
          %v465 = vpack.c.b16 %v409, %v405
          %v466 = vpack.c.b16 %v410, %v406
          %v467 = vpack.c.b16 %v411, %v407
          %v468 = vpack.c.b16 %v416, %v412
          %v469 = vpack.c.b16 %v417, %v413
          %v470 = vpack.c.b16 %v418, %v414
          %v471 = vpack.c.b16 %v419, %v415
          %v472 = vpack.c.b16 %v424, %v420
          %v473 = vpack.c.b16 %v425, %v421
          %v474 = vpack.c.b16 %v426, %v422
          %v475 = vpack.c.b16 %v427, %v423
          %v476 = vpack.c.b16 %v432, %v428
          %v477 = vpack.c.b16 %v433, %v429
          %v478 = vpack.c.b16 %v434, %v430
          %v479 = vpack.c.b16 %v435, %v431
          %v480 = vpack.c.b16 %v440, %v436
          %v481 = vpack.c.b16 %v441, %v437
          %v482 = vpack.c.b16 %v442, %v438
          %v483 = vpack.c.b16 %v443, %v439
          %v484 = vpack.c.b16 %v448, %v444
          %v485 = vpack.c.b16 %v449, %v445
          %v486 = vpack.c.b16 %v450, %v446
          %v487 = vpack.c.b16 %v451, %v447
          %v488 = vpack.c.b16 %v456, %v452
          %v489 = vpack.c.b16 %v457, %v453
          %v490 = vpack.c.b16 %v458, %v454
          %v491 = vpack.c.b16 %v459, %v455
          %524 = vmatprep.subr.bf16.mxu0 %v489
          %525 = vmatpush1.bf16.msra.mxu0 %v488
          %526 = vmatprep.subr.bf16.mxu0 %v485
          %527 = vmatpush1.bf16.msra.mxu0 %v484
          %528 = vmatprep.subr.bf16.mxu0 %v481
          %529 = vmatpush1.bf16.msra.mxu0 %v480
          %530 = vmatprep.subr.bf16.mxu0 %v477
          %531 = vmatpush1.bf16.msra.mxu0 %v476
          %532 = vmatprep.subr.bf16.mxu0 %v473
          %533 = vmatpush1.bf16.msra.mxu0 %v472
          %534 = vmatprep.subr.bf16.mxu0 %v469
          %535 = vmatpush1.bf16.msra.mxu0 %v468
          %536 = vmatprep.subr.bf16.mxu0 %v465
          %537 = vmatpush1.bf16.msra.mxu0 %v464
          %538 = vmatprep.subr.bf16.mxu0 %v461
          %539 = vmatpush1.bf16.msra.mxu0 %v460
          %540 = vmatprep.subr.bf16.mxu0 0
          %541 = vmatpush2.bf16.msra.mxu0 0
          %542 = vmatprep.subr.bf16.mxu0 0
          %543 = vmatpush2.bf16.msra.mxu0 0
          %544 = vmatprep.subr.bf16.mxu0 0
          %545 = vmatpush2.bf16.msra.mxu0 0
          %546 = vmatprep.subr.bf16.mxu0 0
          %547 = vmatpush2.bf16.msra.mxu0 0
          %548 = vmatprep.subr.bf16.mxu0 0
          %549 = vmatpush2.bf16.msra.mxu0 0
          %550 = vmatprep.subr.bf16.mxu0 0
          %551 = vmatpush2.bf16.msra.mxu0 0
          %552 = vmatprep.subr.bf16.mxu0 0
          %553 = vmatpush2.bf16.msra.mxu0 0
          %554 = vmatprep.subr.bf16.mxu0 0
          %555 = vmatpush2.bf16.msra.mxu0 0
          %556 = vmatprep.mubr.bf16.mxu0 0
          %557 = vmatmul.mubr.bf16.gmra.mxu0 %v362
          %v558 = vpop.f32.mrf.mxu0
          %v559 = vadd.f32 %v341, %v558
          %v560 = vpop.f32.mrf.mxu0
          %v561 = vadd.f32 %v345, %v560
          %v562 = vpop.f32.mrf.mxu0
          %v563 = vadd.f32 %v341, %v562
          %v564 = vpop.f32.mrf.mxu0
          %v565 = vadd.f32 %v345, %v564
          %566 = vdwg.mxu0
          %567 = vmatprep.subr.bf16.mxu0 %v491
          %568 = vmatpush1.bf16.msra.mxu0 %v490
          %569 = vmatprep.subr.bf16.mxu0 %v487
          %570 = vmatpush1.bf16.msra.mxu0 %v486
          %571 = vmatprep.subr.bf16.mxu0 %v483
          %572 = vmatpush1.bf16.msra.mxu0 %v482
          %573 = vmatprep.subr.bf16.mxu0 %v479
          %574 = vmatpush1.bf16.msra.mxu0 %v478
          %575 = vmatprep.subr.bf16.mxu0 %v475
          %576 = vmatpush1.bf16.msra.mxu0 %v474
          %577 = vmatprep.subr.bf16.mxu0 %v471
          %578 = vmatpush1.bf16.msra.mxu0 %v470
          %579 = vmatprep.subr.bf16.mxu0 %v467
          %580 = vmatpush1.bf16.msra.mxu0 %v466
          %581 = vmatprep.subr.bf16.mxu0 %v463
          %582 = vmatpush1.bf16.msra.mxu0 %v462
          %583 = vmatprep.subr.bf16.mxu0 0
          %584 = vmatpush2.bf16.msra.mxu0 0
          %585 = vmatprep.subr.bf16.mxu0 0
          %586 = vmatpush2.bf16.msra.mxu0 0
          %587 = vmatprep.subr.bf16.mxu0 0
          %588 = vmatpush2.bf16.msra.mxu0 0
          %589 = vmatprep.subr.bf16.mxu0 0
          %590 = vmatpush2.bf16.msra.mxu0 0
          %591 = vmatprep.subr.bf16.mxu0 0
          %592 = vmatpush2.bf16.msra.mxu0 0
          %593 = vmatprep.subr.bf16.mxu0 0
          %594 = vmatpush2.bf16.msra.mxu0 0
          %595 = vmatprep.subr.bf16.mxu0 0
          %596 = vmatpush2.bf16.msra.mxu0 0
          %597 = vmatprep.subr.bf16.mxu0 0
          %598 = vmatpush2.bf16.msra.mxu0 0
          %599 = vmatprep.mubr.bf16.mxu0 0
          %600 = vmatmul.mubr.bf16.gmra.mxu0 %v362
          %v601 = vpop.f32.mrf.mxu0
          %v602 = vadd.f32 %v349, %v601
          %v603 = vpop.f32.mrf.mxu0
          %v604 = vadd.f32 %v353, %v603
          %v605 = vpop.f32.mrf.mxu0
          %v606 = vadd.f32 %v349, %v605
          %v607 = vpop.f32.mrf.mxu0
          %v608 = vadd.f32 %v353, %v607
          %609 = vdwg.mxu0
          %v610 = vmax.f32 %v559, 0.0
          %v611 = vmax.f32 %v561, 0.0
          %v612 = vmax.f32 %v602, 0.0
          %v613 = vmax.f32 %v604, 0.0
          %v614 = vmax.f32 %v563, 0.0
          %v615 = vmax.f32 %v565, 0.0
          %v616 = vmax.f32 %v606, 0.0
          %v617 = vmax.f32 %v608, 0.0
          %v618 = vadd.f32 %v314, %v610
          %v619 = vadd.f32 %v315, %v611
          %v620 = vadd.f32 %v316, %v612
          %v621 = vadd.f32 %v317, %v613
          %v622 = vadd.f32 %v318, %v614
          %v623 = vadd.f32 %v319, %v615
          %v624 = vadd.f32 %v320, %v616
          %v625 = vadd.f32 %v321, %v617
          %v626 = vmax.f32 %v322, %v610
          %v627 = vmax.f32 %v323, %v611
          %v628 = vmax.f32 %v324, %v612
          %v629 = vmax.f32 %v325, %v613
          %v630 = vmax.f32 %v326, %v614
          %v631 = vmax.f32 %v327, %v615
          %v632 = vmax.f32 %v328, %v616
          %v633 = vmax.f32 %v329, %v617
        $region60: #{two_view_net_forward.1} parent=50 // loop_footer
          %s313 = sadd.s32 1, %s309
        $region61: #{two_view_net_forward.1} parent=50 // loop_footer_branch
          %308 = sbr.rel target = $region57
        $region62: #{two_view_net_forward.1} parent=50 // loop_exit
          _
        %v634 = vadd.f32 %v314, %v318
        %v635 = vrot.slane %v634, 4
        %v636 = vadd.f32 %v634, %v635
        %v637 = vrot.slane %v636, 2
        %v638 = vadd.f32 %v636, %v637
        %v639 = vrot.slane %v638, 1
        %v640 = vadd.f32 %v638, %v639
        %v641 = vadd.f32 %v315, %v319
        %v642 = vrot.slane %v641, 4
        %v643 = vadd.f32 %v641, %v642
        %v644 = vrot.slane %v643, 2
        %v645 = vadd.f32 %v643, %v644
        %v646 = vrot.slane %v645, 1
        %v647 = vadd.f32 %v645, %v646
        %v648 = vadd.f32 %v316, %v320
        %v649 = vrot.slane %v648, 4
        %v650 = vadd.f32 %v648, %v649
        %v651 = vrot.slane %v650, 2
        %v652 = vadd.f32 %v650, %v651
        %v653 = vrot.slane %v652, 1
        %v654 = vadd.f32 %v652, %v653
        %v655 = vadd.f32 %v317, %v321
        %v656 = vrot.slane %v655, 4
        %v657 = vadd.f32 %v655, %v656
        %v658 = vrot.slane %v657, 2
        %v659 = vadd.f32 %v657, %v658
        %v660 = vrot.slane %v659, 1
        %v661 = vadd.f32 %v659, %v660
        %v662 = vmul.f32 %v640, 0.00390625
        %v663 = vmul.f32 %v647, 0.00390625
        %v664 = vmul.f32 %v654, 0.00390625
        %v665 = vmul.f32 %v661, 0.00390625
        %v666 = vmax.f32 %v322, %v326
        %v667 = vrot.slane %v666, 4
        %v668 = vmax.f32 %v666, %v667
        %v669 = vrot.slane %v668, 2
        %v670 = vmax.f32 %v668, %v669
        %v671 = vrot.slane %v670, 1
        %v672 = vmax.f32 %v670, %v671
        %v673 = vmax.f32 %v323, %v327
        %v674 = vrot.slane %v673, 4
        %v675 = vmax.f32 %v673, %v674
        %v676 = vrot.slane %v675, 2
        %v677 = vmax.f32 %v675, %v676
        %v678 = vrot.slane %v677, 1
        %v679 = vmax.f32 %v677, %v678
        %v680 = vmax.f32 %v324, %v328
        %v681 = vrot.slane %v680, 4
        %v682 = vmax.f32 %v680, %v681
        %v683 = vrot.slane %v682, 2
        %v684 = vmax.f32 %v682, %v683
        %v685 = vrot.slane %v684, 1
        %v686 = vmax.f32 %v684, %v685
        %v687 = vmax.f32 %v325, %v329
        %v688 = vrot.slane %v687, 4
        %v689 = vmax.f32 %v687, %v688
        %v690 = vrot.slane %v689, 2
        %v691 = vmax.f32 %v689, %v690
        %v692 = vrot.slane %v691, 1
        %v693 = vmax.f32 %v691, %v692
        loop: start=0, step=1, limit=16
        $region63: #{two_view_net_forward.1} parent=50 // loop_pre_header
          _
        $region64: #{two_view_net_forward.1} parent=50 // loop_header
          %s695 = sphi 0, %s699
          %p696 = scmp.ge.s32.totalorder %s695, 16
          %v700 = vphi 0.0, %v1005
          %v701 = vphi 0.0, %v1006
          %v702 = vphi 0.0, %v1007
          %v703 = vphi 0.0, %v1008
          %v704 = vphi 0.0, %v1009
          %v705 = vphi 0.0, %v1010
          %v706 = vphi 0.0, %v1011
          %v707 = vphi 0.0, %v1012
          %v708 = vphi 0.0, %v1013
          %v709 = vphi 0.0, %v1014
          %v710 = vphi 0.0, %v1015
          %v711 = vphi 0.0, %v1016
          %v712 = vphi 0.0, %v1017
          %v713 = vphi 0.0, %v1018
          %v714 = vphi 0.0, %v1019
          %v715 = vphi 0.0, %v1020
        $region65: #{two_view_net_forward.1} parent=50 // loop_header_branch
          %698 = sbr.rel (%p696) target = $region69
        $region66: #{two_view_net_forward.1} parent=50 // loop_body
          %s716 = smul.u32 %s695, 16
          %s717 = sadd.s32 %s716, 256
          %s718 = sshra.s32 %s717, 3
          %s719 = sand.u32 %s717, 7
          %s720 = smul.addr %s718, 4
          %s721 = scalar_lea.vmem %s0, %s720
          %v722 = vld [vmem:[%s721] sm:$0xf]
          %v723 = vld [vmem:[%s721 + $0x4] sm:$0xf]
          %v725 = vlaneseq
          %v726 = vshrl.u32 %v725, 7
          %v727 = vsub.s32 0, %v726
          %v728 = vrot.slane %v307, %v727
          %v729 = vlaneseq
          %v730 = vshrl.u32 %v729, 7
          %v731 = vsub.s32 1, %v730
          %v732 = vrot.slane %v307, %v731
          %v733 = vlaneseq
          %v734 = vshrl.u32 %v733, 7
          %v735 = vsub.s32 2, %v734
          %v736 = vrot.slane %v307, %v735
          %v737 = vlaneseq
          %v738 = vshrl.u32 %v737, 7
          %v739 = vsub.s32 3, %v738
          %v740 = vrot.slane %v307, %v739
          %v747 = vunpack.c.l.b16 %v722
          %v748 = vunpack.c.l.b16 %v723
          %v749 = vpack.c.b16 %v748, %v747
          %v783 = vunpack.c.l.b16 %v275
          %v784 = vunpack.c.h.b16 %v275
          %v785 = vunpack.c.l.b16 %v276
          %v786 = vunpack.c.h.b16 %v276
          %v787 = vunpack.c.l.b16 %v277
          %v788 = vunpack.c.h.b16 %v277
          %v789 = vunpack.c.l.b16 %v278
          %v790 = vunpack.c.h.b16 %v278
          %v791 = vunpack.c.l.b16 %v279
          %v792 = vunpack.c.h.b16 %v279
          %v793 = vunpack.c.l.b16 %v280
          %v794 = vunpack.c.h.b16 %v280
          %v795 = vunpack.c.l.b16 %v281
          %v796 = vunpack.c.h.b16 %v281
          %v797 = vunpack.c.l.b16 %v282
          %v798 = vunpack.c.h.b16 %v282
          %v799 = vunpack.c.l.b16 %v283
          %v800 = vunpack.c.h.b16 %v283
          %v801 = vunpack.c.l.b16 %v284
          %v802 = vunpack.c.h.b16 %v284
          %v803 = vunpack.c.l.b16 %v285
          %v804 = vunpack.c.h.b16 %v285
          %v805 = vunpack.c.l.b16 %v286
          %v806 = vunpack.c.h.b16 %v286
          %v807 = vunpack.c.l.b16 %v287
          %v808 = vunpack.c.h.b16 %v287
          %v809 = vunpack.c.l.b16 %v288
          %v810 = vunpack.c.h.b16 %v288
          %v811 = vunpack.c.l.b16 %v289
          %v812 = vunpack.c.h.b16 %v289
          %v813 = vunpack.c.l.b16 %v290
          %v814 = vunpack.c.h.b16 %v290
          %v815 = vunpack.c.l.b16 %v291
          %v816 = vunpack.c.h.b16 %v291
          %v817 = vunpack.c.l.b16 %v292
          %v818 = vunpack.c.h.b16 %v292
          %v819 = vunpack.c.l.b16 %v293
          %v820 = vunpack.c.h.b16 %v293
          %v821 = vunpack.c.l.b16 %v294
          %v822 = vunpack.c.h.b16 %v294
          %v823 = vunpack.c.l.b16 %v295
          %v824 = vunpack.c.h.b16 %v295
          %v825 = vunpack.c.l.b16 %v296
          %v826 = vunpack.c.h.b16 %v296
          %v827 = vunpack.c.l.b16 %v297
          %v828 = vunpack.c.h.b16 %v297
          %v829 = vunpack.c.l.b16 %v298
          %v830 = vunpack.c.h.b16 %v298
          %v831 = vunpack.c.l.b16 %v299
          %v832 = vunpack.c.h.b16 %v299
          %v833 = vunpack.c.l.b16 %v300
          %v834 = vunpack.c.h.b16 %v300
          %v835 = vunpack.c.l.b16 %v301
          %v836 = vunpack.c.h.b16 %v301
          %v837 = vunpack.c.l.b16 %v302
          %v838 = vunpack.c.h.b16 %v302
          %v839 = vunpack.c.l.b16 %v303
          %v840 = vunpack.c.h.b16 %v303
          %v841 = vunpack.c.l.b16 %v304
          %v842 = vunpack.c.h.b16 %v304
          %v843 = vunpack.c.l.b16 %v305
          %v844 = vunpack.c.h.b16 %v305
          %v845 = vunpack.c.l.b16 %v306
          %v846 = vunpack.c.h.b16 %v306
          %v847 = vpack.c.b16 %v787, %v783
          %v848 = vpack.c.b16 %v788, %v784
          %v849 = vpack.c.b16 %v789, %v785
          %v850 = vpack.c.b16 %v790, %v786
          %v851 = vpack.c.b16 %v795, %v791
          %v852 = vpack.c.b16 %v796, %v792
          %v853 = vpack.c.b16 %v797, %v793
          %v854 = vpack.c.b16 %v798, %v794
          %v855 = vpack.c.b16 %v803, %v799
          %v856 = vpack.c.b16 %v804, %v800
          %v857 = vpack.c.b16 %v805, %v801
          %v858 = vpack.c.b16 %v806, %v802
          %v859 = vpack.c.b16 %v811, %v807
          %v860 = vpack.c.b16 %v812, %v808
          %v861 = vpack.c.b16 %v813, %v809
          %v862 = vpack.c.b16 %v814, %v810
          %v863 = vpack.c.b16 %v819, %v815
          %v864 = vpack.c.b16 %v820, %v816
          %v865 = vpack.c.b16 %v821, %v817
          %v866 = vpack.c.b16 %v822, %v818
          %v867 = vpack.c.b16 %v827, %v823
          %v868 = vpack.c.b16 %v828, %v824
          %v869 = vpack.c.b16 %v829, %v825
          %v870 = vpack.c.b16 %v830, %v826
          %v871 = vpack.c.b16 %v835, %v831
          %v872 = vpack.c.b16 %v836, %v832
          %v873 = vpack.c.b16 %v837, %v833
          %v874 = vpack.c.b16 %v838, %v834
          %v875 = vpack.c.b16 %v843, %v839
          %v876 = vpack.c.b16 %v844, %v840
          %v877 = vpack.c.b16 %v845, %v841
          %v878 = vpack.c.b16 %v846, %v842
          %911 = vmatprep.subr.bf16.mxu0 %v876
          %912 = vmatpush1.bf16.msra.mxu0 %v875
          %913 = vmatprep.subr.bf16.mxu0 %v872
          %914 = vmatpush1.bf16.msra.mxu0 %v871
          %915 = vmatprep.subr.bf16.mxu0 %v868
          %916 = vmatpush1.bf16.msra.mxu0 %v867
          %917 = vmatprep.subr.bf16.mxu0 %v864
          %918 = vmatpush1.bf16.msra.mxu0 %v863
          %919 = vmatprep.subr.bf16.mxu0 %v860
          %920 = vmatpush1.bf16.msra.mxu0 %v859
          %921 = vmatprep.subr.bf16.mxu0 %v856
          %922 = vmatpush1.bf16.msra.mxu0 %v855
          %923 = vmatprep.subr.bf16.mxu0 %v852
          %924 = vmatpush1.bf16.msra.mxu0 %v851
          %925 = vmatprep.subr.bf16.mxu0 %v848
          %926 = vmatpush1.bf16.msra.mxu0 %v847
          %927 = vmatprep.subr.bf16.mxu0 0
          %928 = vmatpush2.bf16.msra.mxu0 0
          %929 = vmatprep.subr.bf16.mxu0 0
          %930 = vmatpush2.bf16.msra.mxu0 0
          %931 = vmatprep.subr.bf16.mxu0 0
          %932 = vmatpush2.bf16.msra.mxu0 0
          %933 = vmatprep.subr.bf16.mxu0 0
          %934 = vmatpush2.bf16.msra.mxu0 0
          %935 = vmatprep.subr.bf16.mxu0 0
          %936 = vmatpush2.bf16.msra.mxu0 0
          %937 = vmatprep.subr.bf16.mxu0 0
          %938 = vmatpush2.bf16.msra.mxu0 0
          %939 = vmatprep.subr.bf16.mxu0 0
          %940 = vmatpush2.bf16.msra.mxu0 0
          %941 = vmatprep.subr.bf16.mxu0 0
          %942 = vmatpush2.bf16.msra.mxu0 0
          %943 = vmatprep.mubr.bf16.mxu0 0
          %944 = vmatmul.mubr.bf16.gmra.mxu0 %v749
          %v945 = vpop.f32.mrf.mxu0
          %v946 = vadd.f32 %v728, %v945
          %v947 = vpop.f32.mrf.mxu0
          %v948 = vadd.f32 %v732, %v947
          %v949 = vpop.f32.mrf.mxu0
          %v950 = vadd.f32 %v728, %v949
          %v951 = vpop.f32.mrf.mxu0
          %v952 = vadd.f32 %v732, %v951
          %953 = vdwg.mxu0
          %954 = vmatprep.subr.bf16.mxu0 %v878
          %955 = vmatpush1.bf16.msra.mxu0 %v877
          %956 = vmatprep.subr.bf16.mxu0 %v874
          %957 = vmatpush1.bf16.msra.mxu0 %v873
          %958 = vmatprep.subr.bf16.mxu0 %v870
          %959 = vmatpush1.bf16.msra.mxu0 %v869
          %960 = vmatprep.subr.bf16.mxu0 %v866
          %961 = vmatpush1.bf16.msra.mxu0 %v865
          %962 = vmatprep.subr.bf16.mxu0 %v862
          %963 = vmatpush1.bf16.msra.mxu0 %v861
          %964 = vmatprep.subr.bf16.mxu0 %v858
          %965 = vmatpush1.bf16.msra.mxu0 %v857
          %966 = vmatprep.subr.bf16.mxu0 %v854
          %967 = vmatpush1.bf16.msra.mxu0 %v853
          %968 = vmatprep.subr.bf16.mxu0 %v850
          %969 = vmatpush1.bf16.msra.mxu0 %v849
          %970 = vmatprep.subr.bf16.mxu0 0
          %971 = vmatpush2.bf16.msra.mxu0 0
          %972 = vmatprep.subr.bf16.mxu0 0
          %973 = vmatpush2.bf16.msra.mxu0 0
          %974 = vmatprep.subr.bf16.mxu0 0
          %975 = vmatpush2.bf16.msra.mxu0 0
          %976 = vmatprep.subr.bf16.mxu0 0
          %977 = vmatpush2.bf16.msra.mxu0 0
          %978 = vmatprep.subr.bf16.mxu0 0
          %979 = vmatpush2.bf16.msra.mxu0 0
          %980 = vmatprep.subr.bf16.mxu0 0
          %981 = vmatpush2.bf16.msra.mxu0 0
          %982 = vmatprep.subr.bf16.mxu0 0
          %983 = vmatpush2.bf16.msra.mxu0 0
          %984 = vmatprep.subr.bf16.mxu0 0
          %985 = vmatpush2.bf16.msra.mxu0 0
          %986 = vmatprep.mubr.bf16.mxu0 0
          %987 = vmatmul.mubr.bf16.gmra.mxu0 %v749
          %v988 = vpop.f32.mrf.mxu0
          %v989 = vadd.f32 %v736, %v988
          %v990 = vpop.f32.mrf.mxu0
          %v991 = vadd.f32 %v740, %v990
          %v992 = vpop.f32.mrf.mxu0
          %v993 = vadd.f32 %v736, %v992
          %v994 = vpop.f32.mrf.mxu0
          %v995 = vadd.f32 %v740, %v994
          %996 = vdwg.mxu0
          %v997 = vmax.f32 %v946, 0.0
          %v998 = vmax.f32 %v948, 0.0
          %v999 = vmax.f32 %v989, 0.0
          %v1000 = vmax.f32 %v991, 0.0
          %v1001 = vmax.f32 %v950, 0.0
          %v1002 = vmax.f32 %v952, 0.0
          %v1003 = vmax.f32 %v993, 0.0
          %v1004 = vmax.f32 %v995, 0.0
          %v1005 = vadd.f32 %v700, %v997
          %v1006 = vadd.f32 %v701, %v998
          %v1007 = vadd.f32 %v702, %v999
          %v1008 = vadd.f32 %v703, %v1000
          %v1009 = vadd.f32 %v704, %v1001
          %v1010 = vadd.f32 %v705, %v1002
          %v1011 = vadd.f32 %v706, %v1003
          %v1012 = vadd.f32 %v707, %v1004
          %v1013 = vmax.f32 %v708, %v997
          %v1014 = vmax.f32 %v709, %v998
          %v1015 = vmax.f32 %v710, %v999
          %v1016 = vmax.f32 %v711, %v1000
          %v1017 = vmax.f32 %v712, %v1001
          %v1018 = vmax.f32 %v713, %v1002
          %v1019 = vmax.f32 %v714, %v1003
          %v1020 = vmax.f32 %v715, %v1004
        $region67: #{two_view_net_forward.1} parent=50 // loop_footer
          %s699 = sadd.s32 1, %s695
        $region68: #{two_view_net_forward.1} parent=50 // loop_footer_branch
          %694 = sbr.rel target = $region64
        $region69: #{two_view_net_forward.1} parent=50 // loop_exit
          _
        %v1021 = vadd.f32 %v700, %v704
        %v1022 = vrot.slane %v1021, 4
        %v1023 = vadd.f32 %v1021, %v1022
        %v1024 = vrot.slane %v1023, 2
        %v1025 = vadd.f32 %v1023, %v1024
        %v1026 = vrot.slane %v1025, 1
        %v1027 = vadd.f32 %v1025, %v1026
        %v1028 = vadd.f32 %v701, %v705
        %v1029 = vrot.slane %v1028, 4
        %v1030 = vadd.f32 %v1028, %v1029
        %v1031 = vrot.slane %v1030, 2
        %v1032 = vadd.f32 %v1030, %v1031
        %v1033 = vrot.slane %v1032, 1
        %v1034 = vadd.f32 %v1032, %v1033
        %v1035 = vadd.f32 %v702, %v706
        %v1036 = vrot.slane %v1035, 4
        %v1037 = vadd.f32 %v1035, %v1036
        %v1038 = vrot.slane %v1037, 2
        %v1039 = vadd.f32 %v1037, %v1038
        %v1040 = vrot.slane %v1039, 1
        %v1041 = vadd.f32 %v1039, %v1040
        %v1042 = vadd.f32 %v703, %v707
        %v1043 = vrot.slane %v1042, 4
        %v1044 = vadd.f32 %v1042, %v1043
        %v1045 = vrot.slane %v1044, 2
        %v1046 = vadd.f32 %v1044, %v1045
        %v1047 = vrot.slane %v1046, 1
        %v1048 = vadd.f32 %v1046, %v1047
        %v1049 = vmul.f32 %v1027, 0.00390625
        %v1050 = vmul.f32 %v1034, 0.00390625
        %v1051 = vmul.f32 %v1041, 0.00390625
        %v1052 = vmul.f32 %v1048, 0.00390625
        %v1053 = vmax.f32 %v708, %v712
        %v1054 = vrot.slane %v1053, 4
        %v1055 = vmax.f32 %v1053, %v1054
        %v1056 = vrot.slane %v1055, 2
        %v1057 = vmax.f32 %v1055, %v1056
        %v1058 = vrot.slane %v1057, 1
        %v1059 = vmax.f32 %v1057, %v1058
        %v1060 = vmax.f32 %v709, %v713
        %v1061 = vrot.slane %v1060, 4
        %v1062 = vmax.f32 %v1060, %v1061
        %v1063 = vrot.slane %v1062, 2
        %v1064 = vmax.f32 %v1062, %v1063
        %v1065 = vrot.slane %v1064, 1
        %v1066 = vmax.f32 %v1064, %v1065
        %v1067 = vmax.f32 %v710, %v714
        %v1068 = vrot.slane %v1067, 4
        %v1069 = vmax.f32 %v1067, %v1068
        %v1070 = vrot.slane %v1069, 2
        %v1071 = vmax.f32 %v1069, %v1070
        %v1072 = vrot.slane %v1071, 1
        %v1073 = vmax.f32 %v1071, %v1072
        %v1074 = vmax.f32 %v711, %v715
        %v1075 = vrot.slane %v1074, 4
        %v1076 = vmax.f32 %v1074, %v1075
        %v1077 = vrot.slane %v1076, 2
        %v1078 = vmax.f32 %v1076, %v1077
        %v1079 = vrot.slane %v1078, 1
        %v1080 = vmax.f32 %v1078, %v1079
        loop: start=0, step=1, limit=16
        $region70: #{two_view_net_forward.1} parent=50 // loop_pre_header
          _
        $region71: #{two_view_net_forward.1} parent=50 // loop_header
          %s1082 = sphi 0, %s1086
          %p1083 = scmp.ge.s32.totalorder %s1082, 16
          %v1087 = vphi 0.0, %v1392
          %v1088 = vphi 0.0, %v1393
          %v1089 = vphi 0.0, %v1394
          %v1090 = vphi 0.0, %v1395
          %v1091 = vphi 0.0, %v1396
          %v1092 = vphi 0.0, %v1397
          %v1093 = vphi 0.0, %v1398
          %v1094 = vphi 0.0, %v1399
          %v1095 = vphi 0.0, %v1400
          %v1096 = vphi 0.0, %v1401
          %v1097 = vphi 0.0, %v1402
          %v1098 = vphi 0.0, %v1403
          %v1099 = vphi 0.0, %v1404
          %v1100 = vphi 0.0, %v1405
          %v1101 = vphi 0.0, %v1406
          %v1102 = vphi 0.0, %v1407
        $region72: #{two_view_net_forward.1} parent=50 // loop_header_branch
          %1085 = sbr.rel (%p1083) target = $region76
        $region73: #{two_view_net_forward.1} parent=50 // loop_body
          %s1103 = smul.u32 %s1082, 16
          %s1104 = sadd.s32 %s1103, 512
          %s1105 = sshra.s32 %s1104, 3
          %s1106 = sand.u32 %s1104, 7
          %s1107 = smul.addr %s1105, 4
          %s1108 = scalar_lea.vmem %s0, %s1107
          %v1109 = vld [vmem:[%s1108] sm:$0xf]
          %v1110 = vld [vmem:[%s1108 + $0x4] sm:$0xf]
          %v1112 = vlaneseq
          %v1113 = vshrl.u32 %v1112, 7
          %v1114 = vsub.s32 0, %v1113
          %v1115 = vrot.slane %v307, %v1114
          %v1116 = vlaneseq
          %v1117 = vshrl.u32 %v1116, 7
          %v1118 = vsub.s32 1, %v1117
          %v1119 = vrot.slane %v307, %v1118
          %v1120 = vlaneseq
          %v1121 = vshrl.u32 %v1120, 7
          %v1122 = vsub.s32 2, %v1121
          %v1123 = vrot.slane %v307, %v1122
          %v1124 = vlaneseq
          %v1125 = vshrl.u32 %v1124, 7
          %v1126 = vsub.s32 3, %v1125
          %v1127 = vrot.slane %v307, %v1126
          %v1134 = vunpack.c.l.b16 %v1109
          %v1135 = vunpack.c.l.b16 %v1110
          %v1136 = vpack.c.b16 %v1135, %v1134
          %v1170 = vunpack.c.l.b16 %v275
          %v1171 = vunpack.c.h.b16 %v275
          %v1172 = vunpack.c.l.b16 %v276
          %v1173 = vunpack.c.h.b16 %v276
          %v1174 = vunpack.c.l.b16 %v277
          %v1175 = vunpack.c.h.b16 %v277
          %v1176 = vunpack.c.l.b16 %v278
          %v1177 = vunpack.c.h.b16 %v278
          %v1178 = vunpack.c.l.b16 %v279
          %v1179 = vunpack.c.h.b16 %v279
          %v1180 = vunpack.c.l.b16 %v280
          %v1181 = vunpack.c.h.b16 %v280
          %v1182 = vunpack.c.l.b16 %v281
          %v1183 = vunpack.c.h.b16 %v281
          %v1184 = vunpack.c.l.b16 %v282
          %v1185 = vunpack.c.h.b16 %v282
          %v1186 = vunpack.c.l.b16 %v283
          %v1187 = vunpack.c.h.b16 %v283
          %v1188 = vunpack.c.l.b16 %v284
          %v1189 = vunpack.c.h.b16 %v284
          %v1190 = vunpack.c.l.b16 %v285
          %v1191 = vunpack.c.h.b16 %v285
          %v1192 = vunpack.c.l.b16 %v286
          %v1193 = vunpack.c.h.b16 %v286
          %v1194 = vunpack.c.l.b16 %v287
          %v1195 = vunpack.c.h.b16 %v287
          %v1196 = vunpack.c.l.b16 %v288
          %v1197 = vunpack.c.h.b16 %v288
          %v1198 = vunpack.c.l.b16 %v289
          %v1199 = vunpack.c.h.b16 %v289
          %v1200 = vunpack.c.l.b16 %v290
          %v1201 = vunpack.c.h.b16 %v290
          %v1202 = vunpack.c.l.b16 %v291
          %v1203 = vunpack.c.h.b16 %v291
          %v1204 = vunpack.c.l.b16 %v292
          %v1205 = vunpack.c.h.b16 %v292
          %v1206 = vunpack.c.l.b16 %v293
          %v1207 = vunpack.c.h.b16 %v293
          %v1208 = vunpack.c.l.b16 %v294
          %v1209 = vunpack.c.h.b16 %v294
          %v1210 = vunpack.c.l.b16 %v295
          %v1211 = vunpack.c.h.b16 %v295
          %v1212 = vunpack.c.l.b16 %v296
          %v1213 = vunpack.c.h.b16 %v296
          %v1214 = vunpack.c.l.b16 %v297
          %v1215 = vunpack.c.h.b16 %v297
          %v1216 = vunpack.c.l.b16 %v298
          %v1217 = vunpack.c.h.b16 %v298
          %v1218 = vunpack.c.l.b16 %v299
          %v1219 = vunpack.c.h.b16 %v299
          %v1220 = vunpack.c.l.b16 %v300
          %v1221 = vunpack.c.h.b16 %v300
          %v1222 = vunpack.c.l.b16 %v301
          %v1223 = vunpack.c.h.b16 %v301
          %v1224 = vunpack.c.l.b16 %v302
          %v1225 = vunpack.c.h.b16 %v302
          %v1226 = vunpack.c.l.b16 %v303
          %v1227 = vunpack.c.h.b16 %v303
          %v1228 = vunpack.c.l.b16 %v304
          %v1229 = vunpack.c.h.b16 %v304
          %v1230 = vunpack.c.l.b16 %v305
          %v1231 = vunpack.c.h.b16 %v305
          %v1232 = vunpack.c.l.b16 %v306
          %v1233 = vunpack.c.h.b16 %v306
          %v1234 = vpack.c.b16 %v1174, %v1170
          %v1235 = vpack.c.b16 %v1175, %v1171
          %v1236 = vpack.c.b16 %v1176, %v1172
          %v1237 = vpack.c.b16 %v1177, %v1173
          %v1238 = vpack.c.b16 %v1182, %v1178
          %v1239 = vpack.c.b16 %v1183, %v1179
          %v1240 = vpack.c.b16 %v1184, %v1180
          %v1241 = vpack.c.b16 %v1185, %v1181
          %v1242 = vpack.c.b16 %v1190, %v1186
          %v1243 = vpack.c.b16 %v1191, %v1187
          %v1244 = vpack.c.b16 %v1192, %v1188
          %v1245 = vpack.c.b16 %v1193, %v1189
          %v1246 = vpack.c.b16 %v1198, %v1194
          %v1247 = vpack.c.b16 %v1199, %v1195
          %v1248 = vpack.c.b16 %v1200, %v1196
          %v1249 = vpack.c.b16 %v1201, %v1197
          %v1250 = vpack.c.b16 %v1206, %v1202
          %v1251 = vpack.c.b16 %v1207, %v1203
          %v1252 = vpack.c.b16 %v1208, %v1204
          %v1253 = vpack.c.b16 %v1209, %v1205
          %v1254 = vpack.c.b16 %v1214, %v1210
          %v1255 = vpack.c.b16 %v1215, %v1211
          %v1256 = vpack.c.b16 %v1216, %v1212
          %v1257 = vpack.c.b16 %v1217, %v1213
          %v1258 = vpack.c.b16 %v1222, %v1218
          %v1259 = vpack.c.b16 %v1223, %v1219
          %v1260 = vpack.c.b16 %v1224, %v1220
          %v1261 = vpack.c.b16 %v1225, %v1221
          %v1262 = vpack.c.b16 %v1230, %v1226
          %v1263 = vpack.c.b16 %v1231, %v1227
          %v1264 = vpack.c.b16 %v1232, %v1228
          %v1265 = vpack.c.b16 %v1233, %v1229
          %1298 = vmatprep.subr.bf16.mxu0 %v1263
          %1299 = vmatpush1.bf16.msra.mxu0 %v1262
          %1300 = vmatprep.subr.bf16.mxu0 %v1259
          %1301 = vmatpush1.bf16.msra.mxu0 %v1258
          %1302 = vmatprep.subr.bf16.mxu0 %v1255
          %1303 = vmatpush1.bf16.msra.mxu0 %v1254
          %1304 = vmatprep.subr.bf16.mxu0 %v1251
          %1305 = vmatpush1.bf16.msra.mxu0 %v1250
          %1306 = vmatprep.subr.bf16.mxu0 %v1247
          %1307 = vmatpush1.bf16.msra.mxu0 %v1246
          %1308 = vmatprep.subr.bf16.mxu0 %v1243
          %1309 = vmatpush1.bf16.msra.mxu0 %v1242
          %1310 = vmatprep.subr.bf16.mxu0 %v1239
          %1311 = vmatpush1.bf16.msra.mxu0 %v1238
          %1312 = vmatprep.subr.bf16.mxu0 %v1235
          %1313 = vmatpush1.bf16.msra.mxu0 %v1234
          %1314 = vmatprep.subr.bf16.mxu0 0
          %1315 = vmatpush2.bf16.msra.mxu0 0
          %1316 = vmatprep.subr.bf16.mxu0 0
          %1317 = vmatpush2.bf16.msra.mxu0 0
          %1318 = vmatprep.subr.bf16.mxu0 0
          %1319 = vmatpush2.bf16.msra.mxu0 0
          %1320 = vmatprep.subr.bf16.mxu0 0
          %1321 = vmatpush2.bf16.msra.mxu0 0
          %1322 = vmatprep.subr.bf16.mxu0 0
          %1323 = vmatpush2.bf16.msra.mxu0 0
          %1324 = vmatprep.subr.bf16.mxu0 0
          %1325 = vmatpush2.bf16.msra.mxu0 0
          %1326 = vmatprep.subr.bf16.mxu0 0
          %1327 = vmatpush2.bf16.msra.mxu0 0
          %1328 = vmatprep.subr.bf16.mxu0 0
          %1329 = vmatpush2.bf16.msra.mxu0 0
          %1330 = vmatprep.mubr.bf16.mxu0 0
          %1331 = vmatmul.mubr.bf16.gmra.mxu0 %v1136
          %v1332 = vpop.f32.mrf.mxu0
          %v1333 = vadd.f32 %v1115, %v1332
          %v1334 = vpop.f32.mrf.mxu0
          %v1335 = vadd.f32 %v1119, %v1334
          %v1336 = vpop.f32.mrf.mxu0
          %v1337 = vadd.f32 %v1115, %v1336
          %v1338 = vpop.f32.mrf.mxu0
          %v1339 = vadd.f32 %v1119, %v1338
          %1340 = vdwg.mxu0
          %1341 = vmatprep.subr.bf16.mxu0 %v1265
          %1342 = vmatpush1.bf16.msra.mxu0 %v1264
          %1343 = vmatprep.subr.bf16.mxu0 %v1261
          %1344 = vmatpush1.bf16.msra.mxu0 %v1260
          %1345 = vmatprep.subr.bf16.mxu0 %v1257
          %1346 = vmatpush1.bf16.msra.mxu0 %v1256
          %1347 = vmatprep.subr.bf16.mxu0 %v1253
          %1348 = vmatpush1.bf16.msra.mxu0 %v1252
          %1349 = vmatprep.subr.bf16.mxu0 %v1249
          %1350 = vmatpush1.bf16.msra.mxu0 %v1248
          %1351 = vmatprep.subr.bf16.mxu0 %v1245
          %1352 = vmatpush1.bf16.msra.mxu0 %v1244
          %1353 = vmatprep.subr.bf16.mxu0 %v1241
          %1354 = vmatpush1.bf16.msra.mxu0 %v1240
          %1355 = vmatprep.subr.bf16.mxu0 %v1237
          %1356 = vmatpush1.bf16.msra.mxu0 %v1236
          %1357 = vmatprep.subr.bf16.mxu0 0
          %1358 = vmatpush2.bf16.msra.mxu0 0
          %1359 = vmatprep.subr.bf16.mxu0 0
          %1360 = vmatpush2.bf16.msra.mxu0 0
          %1361 = vmatprep.subr.bf16.mxu0 0
          %1362 = vmatpush2.bf16.msra.mxu0 0
          %1363 = vmatprep.subr.bf16.mxu0 0
          %1364 = vmatpush2.bf16.msra.mxu0 0
          %1365 = vmatprep.subr.bf16.mxu0 0
          %1366 = vmatpush2.bf16.msra.mxu0 0
          %1367 = vmatprep.subr.bf16.mxu0 0
          %1368 = vmatpush2.bf16.msra.mxu0 0
          %1369 = vmatprep.subr.bf16.mxu0 0
          %1370 = vmatpush2.bf16.msra.mxu0 0
          %1371 = vmatprep.subr.bf16.mxu0 0
          %1372 = vmatpush2.bf16.msra.mxu0 0
          %1373 = vmatprep.mubr.bf16.mxu0 0
          %1374 = vmatmul.mubr.bf16.gmra.mxu0 %v1136
          %v1375 = vpop.f32.mrf.mxu0
          %v1376 = vadd.f32 %v1123, %v1375
          %v1377 = vpop.f32.mrf.mxu0
          %v1378 = vadd.f32 %v1127, %v1377
          %v1379 = vpop.f32.mrf.mxu0
          %v1380 = vadd.f32 %v1123, %v1379
          %v1381 = vpop.f32.mrf.mxu0
          %v1382 = vadd.f32 %v1127, %v1381
          %1383 = vdwg.mxu0
          %v1384 = vmax.f32 %v1333, 0.0
          %v1385 = vmax.f32 %v1335, 0.0
          %v1386 = vmax.f32 %v1376, 0.0
          %v1387 = vmax.f32 %v1378, 0.0
          %v1388 = vmax.f32 %v1337, 0.0
          %v1389 = vmax.f32 %v1339, 0.0
          %v1390 = vmax.f32 %v1380, 0.0
          %v1391 = vmax.f32 %v1382, 0.0
          %v1392 = vadd.f32 %v1087, %v1384
          %v1393 = vadd.f32 %v1088, %v1385
          %v1394 = vadd.f32 %v1089, %v1386
          %v1395 = vadd.f32 %v1090, %v1387
          %v1396 = vadd.f32 %v1091, %v1388
          %v1397 = vadd.f32 %v1092, %v1389
          %v1398 = vadd.f32 %v1093, %v1390
          %v1399 = vadd.f32 %v1094, %v1391
          %v1400 = vmax.f32 %v1095, %v1384
          %v1401 = vmax.f32 %v1096, %v1385
          %v1402 = vmax.f32 %v1097, %v1386
          %v1403 = vmax.f32 %v1098, %v1387
          %v1404 = vmax.f32 %v1099, %v1388
          %v1405 = vmax.f32 %v1100, %v1389
          %v1406 = vmax.f32 %v1101, %v1390
          %v1407 = vmax.f32 %v1102, %v1391
        $region74: #{two_view_net_forward.1} parent=50 // loop_footer
          %s1086 = sadd.s32 1, %s1082
        $region75: #{two_view_net_forward.1} parent=50 // loop_footer_branch
          %1081 = sbr.rel target = $region71
        $region76: #{two_view_net_forward.1} parent=50 // loop_exit
          _
        %v1408 = vadd.f32 %v1087, %v1091
        %v1409 = vrot.slane %v1408, 4
        %v1410 = vadd.f32 %v1408, %v1409
        %v1411 = vrot.slane %v1410, 2
        %v1412 = vadd.f32 %v1410, %v1411
        %v1413 = vrot.slane %v1412, 1
        %v1414 = vadd.f32 %v1412, %v1413
        %v1415 = vadd.f32 %v1088, %v1092
        %v1416 = vrot.slane %v1415, 4
        %v1417 = vadd.f32 %v1415, %v1416
        %v1418 = vrot.slane %v1417, 2
        %v1419 = vadd.f32 %v1417, %v1418
        %v1420 = vrot.slane %v1419, 1
        %v1421 = vadd.f32 %v1419, %v1420
        %v1422 = vadd.f32 %v1089, %v1093
        %v1423 = vrot.slane %v1422, 4
        %v1424 = vadd.f32 %v1422, %v1423
        %v1425 = vrot.slane %v1424, 2
        %v1426 = vadd.f32 %v1424, %v1425
        %v1427 = vrot.slane %v1426, 1
        %v1428 = vadd.f32 %v1426, %v1427
        %v1429 = vadd.f32 %v1090, %v1094
        %v1430 = vrot.slane %v1429, 4
        %v1431 = vadd.f32 %v1429, %v1430
        %v1432 = vrot.slane %v1431, 2
        %v1433 = vadd.f32 %v1431, %v1432
        %v1434 = vrot.slane %v1433, 1
        %v1435 = vadd.f32 %v1433, %v1434
        %v1436 = vmul.f32 %v1414, 0.00390625
        %v1437 = vmul.f32 %v1421, 0.00390625
        %v1438 = vmul.f32 %v1428, 0.00390625
        %v1439 = vmul.f32 %v1435, 0.00390625
        %v1440 = vmax.f32 %v1095, %v1099
        %v1441 = vrot.slane %v1440, 4
        %v1442 = vmax.f32 %v1440, %v1441
        %v1443 = vrot.slane %v1442, 2
        %v1444 = vmax.f32 %v1442, %v1443
        %v1445 = vrot.slane %v1444, 1
        %v1446 = vmax.f32 %v1444, %v1445
        %v1447 = vmax.f32 %v1096, %v1100
        %v1448 = vrot.slane %v1447, 4
        %v1449 = vmax.f32 %v1447, %v1448
        %v1450 = vrot.slane %v1449, 2
        %v1451 = vmax.f32 %v1449, %v1450
        %v1452 = vrot.slane %v1451, 1
        %v1453 = vmax.f32 %v1451, %v1452
        %v1454 = vmax.f32 %v1097, %v1101
        %v1455 = vrot.slane %v1454, 4
        %v1456 = vmax.f32 %v1454, %v1455
        %v1457 = vrot.slane %v1456, 2
        %v1458 = vmax.f32 %v1456, %v1457
        %v1459 = vrot.slane %v1458, 1
        %v1460 = vmax.f32 %v1458, %v1459
        %v1461 = vmax.f32 %v1098, %v1102
        %v1462 = vrot.slane %v1461, 4
        %v1463 = vmax.f32 %v1461, %v1462
        %v1464 = vrot.slane %v1463, 2
        %v1465 = vmax.f32 %v1463, %v1464
        %v1466 = vrot.slane %v1465, 1
        %v1467 = vmax.f32 %v1465, %v1466
        loop: start=0, step=1, limit=16
        $region77: #{two_view_net_forward.1} parent=50 // loop_pre_header
          _
        $region78: #{two_view_net_forward.1} parent=50 // loop_header
          %s1469 = sphi 0, %s1473
          %p1470 = scmp.ge.s32.totalorder %s1469, 16
          %v1474 = vphi 0.0, %v1779
          %v1475 = vphi 0.0, %v1780
          %v1476 = vphi 0.0, %v1781
          %v1477 = vphi 0.0, %v1782
          %v1478 = vphi 0.0, %v1783
          %v1479 = vphi 0.0, %v1784
          %v1480 = vphi 0.0, %v1785
          %v1481 = vphi 0.0, %v1786
          %v1482 = vphi 0.0, %v1787
          %v1483 = vphi 0.0, %v1788
          %v1484 = vphi 0.0, %v1789
          %v1485 = vphi 0.0, %v1790
          %v1486 = vphi 0.0, %v1791
          %v1487 = vphi 0.0, %v1792
          %v1488 = vphi 0.0, %v1793
          %v1489 = vphi 0.0, %v1794
        $region79: #{two_view_net_forward.1} parent=50 // loop_header_branch
          %1472 = sbr.rel (%p1470) target = $region83
        $region80: #{two_view_net_forward.1} parent=50 // loop_body
          %s1490 = smul.u32 %s1469, 16
          %s1491 = sadd.s32 %s1490, 768
          %s1492 = sshra.s32 %s1491, 3
          %s1493 = sand.u32 %s1491, 7
          %s1494 = smul.addr %s1492, 4
          %s1495 = scalar_lea.vmem %s0, %s1494
          %v1496 = vld [vmem:[%s1495] sm:$0xf]
          %v1497 = vld [vmem:[%s1495 + $0x4] sm:$0xf]
          %v1499 = vlaneseq
          %v1500 = vshrl.u32 %v1499, 7
          %v1501 = vsub.s32 0, %v1500
          %v1502 = vrot.slane %v307, %v1501
          %v1503 = vlaneseq
          %v1504 = vshrl.u32 %v1503, 7
          %v1505 = vsub.s32 1, %v1504
          %v1506 = vrot.slane %v307, %v1505
          %v1507 = vlaneseq
          %v1508 = vshrl.u32 %v1507, 7
          %v1509 = vsub.s32 2, %v1508
          %v1510 = vrot.slane %v307, %v1509
          %v1511 = vlaneseq
          %v1512 = vshrl.u32 %v1511, 7
          %v1513 = vsub.s32 3, %v1512
          %v1514 = vrot.slane %v307, %v1513
          %v1521 = vunpack.c.l.b16 %v1496
          %v1522 = vunpack.c.l.b16 %v1497
          %v1523 = vpack.c.b16 %v1522, %v1521
          %v1557 = vunpack.c.l.b16 %v275
          %v1558 = vunpack.c.h.b16 %v275
          %v1559 = vunpack.c.l.b16 %v276
          %v1560 = vunpack.c.h.b16 %v276
          %v1561 = vunpack.c.l.b16 %v277
          %v1562 = vunpack.c.h.b16 %v277
          %v1563 = vunpack.c.l.b16 %v278
          %v1564 = vunpack.c.h.b16 %v278
          %v1565 = vunpack.c.l.b16 %v279
          %v1566 = vunpack.c.h.b16 %v279
          %v1567 = vunpack.c.l.b16 %v280
          %v1568 = vunpack.c.h.b16 %v280
          %v1569 = vunpack.c.l.b16 %v281
          %v1570 = vunpack.c.h.b16 %v281
          %v1571 = vunpack.c.l.b16 %v282
          %v1572 = vunpack.c.h.b16 %v282
          %v1573 = vunpack.c.l.b16 %v283
          %v1574 = vunpack.c.h.b16 %v283
          %v1575 = vunpack.c.l.b16 %v284
          %v1576 = vunpack.c.h.b16 %v284
          %v1577 = vunpack.c.l.b16 %v285
          %v1578 = vunpack.c.h.b16 %v285
          %v1579 = vunpack.c.l.b16 %v286
          %v1580 = vunpack.c.h.b16 %v286
          %v1581 = vunpack.c.l.b16 %v287
          %v1582 = vunpack.c.h.b16 %v287
          %v1583 = vunpack.c.l.b16 %v288
          %v1584 = vunpack.c.h.b16 %v288
          %v1585 = vunpack.c.l.b16 %v289
          %v1586 = vunpack.c.h.b16 %v289
          %v1587 = vunpack.c.l.b16 %v290
          %v1588 = vunpack.c.h.b16 %v290
          %v1589 = vunpack.c.l.b16 %v291
          %v1590 = vunpack.c.h.b16 %v291
          %v1591 = vunpack.c.l.b16 %v292
          %v1592 = vunpack.c.h.b16 %v292
          %v1593 = vunpack.c.l.b16 %v293
          %v1594 = vunpack.c.h.b16 %v293
          %v1595 = vunpack.c.l.b16 %v294
          %v1596 = vunpack.c.h.b16 %v294
          %v1597 = vunpack.c.l.b16 %v295
          %v1598 = vunpack.c.h.b16 %v295
          %v1599 = vunpack.c.l.b16 %v296
          %v1600 = vunpack.c.h.b16 %v296
          %v1601 = vunpack.c.l.b16 %v297
          %v1602 = vunpack.c.h.b16 %v297
          %v1603 = vunpack.c.l.b16 %v298
          %v1604 = vunpack.c.h.b16 %v298
          %v1605 = vunpack.c.l.b16 %v299
          %v1606 = vunpack.c.h.b16 %v299
          %v1607 = vunpack.c.l.b16 %v300
          %v1608 = vunpack.c.h.b16 %v300
          %v1609 = vunpack.c.l.b16 %v301
          %v1610 = vunpack.c.h.b16 %v301
          %v1611 = vunpack.c.l.b16 %v302
          %v1612 = vunpack.c.h.b16 %v302
          %v1613 = vunpack.c.l.b16 %v303
          %v1614 = vunpack.c.h.b16 %v303
          %v1615 = vunpack.c.l.b16 %v304
          %v1616 = vunpack.c.h.b16 %v304
          %v1617 = vunpack.c.l.b16 %v305
          %v1618 = vunpack.c.h.b16 %v305
          %v1619 = vunpack.c.l.b16 %v306
          %v1620 = vunpack.c.h.b16 %v306
          %v1621 = vpack.c.b16 %v1561, %v1557
          %v1622 = vpack.c.b16 %v1562, %v1558
          %v1623 = vpack.c.b16 %v1563, %v1559
          %v1624 = vpack.c.b16 %v1564, %v1560
          %v1625 = vpack.c.b16 %v1569, %v1565
          %v1626 = vpack.c.b16 %v1570, %v1566
          %v1627 = vpack.c.b16 %v1571, %v1567
          %v1628 = vpack.c.b16 %v1572, %v1568
          %v1629 = vpack.c.b16 %v1577, %v1573
          %v1630 = vpack.c.b16 %v1578, %v1574
          %v1631 = vpack.c.b16 %v1579, %v1575
          %v1632 = vpack.c.b16 %v1580, %v1576
          %v1633 = vpack.c.b16 %v1585, %v1581
          %v1634 = vpack.c.b16 %v1586, %v1582
          %v1635 = vpack.c.b16 %v1587, %v1583
          %v1636 = vpack.c.b16 %v1588, %v1584
          %v1637 = vpack.c.b16 %v1593, %v1589
          %v1638 = vpack.c.b16 %v1594, %v1590
          %v1639 = vpack.c.b16 %v1595, %v1591
          %v1640 = vpack.c.b16 %v1596, %v1592
          %v1641 = vpack.c.b16 %v1601, %v1597
          %v1642 = vpack.c.b16 %v1602, %v1598
          %v1643 = vpack.c.b16 %v1603, %v1599
          %v1644 = vpack.c.b16 %v1604, %v1600
          %v1645 = vpack.c.b16 %v1609, %v1605
          %v1646 = vpack.c.b16 %v1610, %v1606
          %v1647 = vpack.c.b16 %v1611, %v1607
          %v1648 = vpack.c.b16 %v1612, %v1608
          %v1649 = vpack.c.b16 %v1617, %v1613
          %v1650 = vpack.c.b16 %v1618, %v1614
          %v1651 = vpack.c.b16 %v1619, %v1615
          %v1652 = vpack.c.b16 %v1620, %v1616
          %1685 = vmatprep.subr.bf16.mxu0 %v1650
          %1686 = vmatpush1.bf16.msra.mxu0 %v1649
          %1687 = vmatprep.subr.bf16.mxu0 %v1646
          %1688 = vmatpush1.bf16.msra.mxu0 %v1645
          %1689 = vmatprep.subr.bf16.mxu0 %v1642
          %1690 = vmatpush1.bf16.msra.mxu0 %v1641
          %1691 = vmatprep.subr.bf16.mxu0 %v1638
          %1692 = vmatpush1.bf16.msra.mxu0 %v1637
          %1693 = vmatprep.subr.bf16.mxu0 %v1634
          %1694 = vmatpush1.bf16.msra.mxu0 %v1633
          %1695 = vmatprep.subr.bf16.mxu0 %v1630
          %1696 = vmatpush1.bf16.msra.mxu0 %v1629
          %1697 = vmatprep.subr.bf16.mxu0 %v1626
          %1698 = vmatpush1.bf16.msra.mxu0 %v1625
          %1699 = vmatprep.subr.bf16.mxu0 %v1622
          %1700 = vmatpush1.bf16.msra.mxu0 %v1621
          %1701 = vmatprep.subr.bf16.mxu0 0
          %1702 = vmatpush2.bf16.msra.mxu0 0
          %1703 = vmatprep.subr.bf16.mxu0 0
          %1704 = vmatpush2.bf16.msra.mxu0 0
          %1705 = vmatprep.subr.bf16.mxu0 0
          %1706 = vmatpush2.bf16.msra.mxu0 0
          %1707 = vmatprep.subr.bf16.mxu0 0
          %1708 = vmatpush2.bf16.msra.mxu0 0
          %1709 = vmatprep.subr.bf16.mxu0 0
          %1710 = vmatpush2.bf16.msra.mxu0 0
          %1711 = vmatprep.subr.bf16.mxu0 0
          %1712 = vmatpush2.bf16.msra.mxu0 0
          %1713 = vmatprep.subr.bf16.mxu0 0
          %1714 = vmatpush2.bf16.msra.mxu0 0
          %1715 = vmatprep.subr.bf16.mxu0 0
          %1716 = vmatpush2.bf16.msra.mxu0 0
          %1717 = vmatprep.mubr.bf16.mxu0 0
          %1718 = vmatmul.mubr.bf16.gmra.mxu0 %v1523
          %v1719 = vpop.f32.mrf.mxu0
          %v1720 = vadd.f32 %v1502, %v1719
          %v1721 = vpop.f32.mrf.mxu0
          %v1722 = vadd.f32 %v1506, %v1721
          %v1723 = vpop.f32.mrf.mxu0
          %v1724 = vadd.f32 %v1502, %v1723
          %v1725 = vpop.f32.mrf.mxu0
          %v1726 = vadd.f32 %v1506, %v1725
          %1727 = vdwg.mxu0
          %1728 = vmatprep.subr.bf16.mxu0 %v1652
          %1729 = vmatpush1.bf16.msra.mxu0 %v1651
          %1730 = vmatprep.subr.bf16.mxu0 %v1648
          %1731 = vmatpush1.bf16.msra.mxu0 %v1647
          %1732 = vmatprep.subr.bf16.mxu0 %v1644
          %1733 = vmatpush1.bf16.msra.mxu0 %v1643
          %1734 = vmatprep.subr.bf16.mxu0 %v1640
          %1735 = vmatpush1.bf16.msra.mxu0 %v1639
          %1736 = vmatprep.subr.bf16.mxu0 %v1636
          %1737 = vmatpush1.bf16.msra.mxu0 %v1635
          %1738 = vmatprep.subr.bf16.mxu0 %v1632
          %1739 = vmatpush1.bf16.msra.mxu0 %v1631
          %1740 = vmatprep.subr.bf16.mxu0 %v1628
          %1741 = vmatpush1.bf16.msra.mxu0 %v1627
          %1742 = vmatprep.subr.bf16.mxu0 %v1624
          %1743 = vmatpush1.bf16.msra.mxu0 %v1623
          %1744 = vmatprep.subr.bf16.mxu0 0
          %1745 = vmatpush2.bf16.msra.mxu0 0
          %1746 = vmatprep.subr.bf16.mxu0 0
          %1747 = vmatpush2.bf16.msra.mxu0 0
          %1748 = vmatprep.subr.bf16.mxu0 0
          %1749 = vmatpush2.bf16.msra.mxu0 0
          %1750 = vmatprep.subr.bf16.mxu0 0
          %1751 = vmatpush2.bf16.msra.mxu0 0
          %1752 = vmatprep.subr.bf16.mxu0 0
          %1753 = vmatpush2.bf16.msra.mxu0 0
          %1754 = vmatprep.subr.bf16.mxu0 0
          %1755 = vmatpush2.bf16.msra.mxu0 0
          %1756 = vmatprep.subr.bf16.mxu0 0
          %1757 = vmatpush2.bf16.msra.mxu0 0
          %1758 = vmatprep.subr.bf16.mxu0 0
          %1759 = vmatpush2.bf16.msra.mxu0 0
          %1760 = vmatprep.mubr.bf16.mxu0 0
          %1761 = vmatmul.mubr.bf16.gmra.mxu0 %v1523
          %v1762 = vpop.f32.mrf.mxu0
          %v1763 = vadd.f32 %v1510, %v1762
          %v1764 = vpop.f32.mrf.mxu0
          %v1765 = vadd.f32 %v1514, %v1764
          %v1766 = vpop.f32.mrf.mxu0
          %v1767 = vadd.f32 %v1510, %v1766
          %v1768 = vpop.f32.mrf.mxu0
          %v1769 = vadd.f32 %v1514, %v1768
          %1770 = vdwg.mxu0
          %v1771 = vmax.f32 %v1720, 0.0
          %v1772 = vmax.f32 %v1722, 0.0
          %v1773 = vmax.f32 %v1763, 0.0
          %v1774 = vmax.f32 %v1765, 0.0
          %v1775 = vmax.f32 %v1724, 0.0
          %v1776 = vmax.f32 %v1726, 0.0
          %v1777 = vmax.f32 %v1767, 0.0
          %v1778 = vmax.f32 %v1769, 0.0
          %v1779 = vadd.f32 %v1474, %v1771
          %v1780 = vadd.f32 %v1475, %v1772
          %v1781 = vadd.f32 %v1476, %v1773
          %v1782 = vadd.f32 %v1477, %v1774
          %v1783 = vadd.f32 %v1478, %v1775
          %v1784 = vadd.f32 %v1479, %v1776
          %v1785 = vadd.f32 %v1480, %v1777
          %v1786 = vadd.f32 %v1481, %v1778
          %v1787 = vmax.f32 %v1482, %v1771
          %v1788 = vmax.f32 %v1483, %v1772
          %v1789 = vmax.f32 %v1484, %v1773
          %v1790 = vmax.f32 %v1485, %v1774
          %v1791 = vmax.f32 %v1486, %v1775
          %v1792 = vmax.f32 %v1487, %v1776
          %v1793 = vmax.f32 %v1488, %v1777
          %v1794 = vmax.f32 %v1489, %v1778
        $region81: #{two_view_net_forward.1} parent=50 // loop_footer
          %s1473 = sadd.s32 1, %s1469
        $region82: #{two_view_net_forward.1} parent=50 // loop_footer_branch
          %1468 = sbr.rel target = $region78
        $region83: #{two_view_net_forward.1} parent=50 // loop_exit
          _
        %v1795 = vadd.f32 %v1474, %v1478
        %v1796 = vrot.slane %v1795, 4
        %v1797 = vadd.f32 %v1795, %v1796
        %v1798 = vrot.slane %v1797, 2
        %v1799 = vadd.f32 %v1797, %v1798
        %v1800 = vrot.slane %v1799, 1
        %v1801 = vadd.f32 %v1799, %v1800
        %v1802 = vadd.f32 %v1475, %v1479
        %v1803 = vrot.slane %v1802, 4
        %v1804 = vadd.f32 %v1802, %v1803
        %v1805 = vrot.slane %v1804, 2
        %v1806 = vadd.f32 %v1804, %v1805
        %v1807 = vrot.slane %v1806, 1
        %v1808 = vadd.f32 %v1806, %v1807
        %v1809 = vadd.f32 %v1476, %v1480
        %v1810 = vrot.slane %v1809, 4
        %v1811 = vadd.f32 %v1809, %v1810
        %v1812 = vrot.slane %v1811, 2
        %v1813 = vadd.f32 %v1811, %v1812
        %v1814 = vrot.slane %v1813, 1
        %v1815 = vadd.f32 %v1813, %v1814
        %v1816 = vadd.f32 %v1477, %v1481
        %v1817 = vrot.slane %v1816, 4
        %v1818 = vadd.f32 %v1816, %v1817
        %v1819 = vrot.slane %v1818, 2
        %v1820 = vadd.f32 %v1818, %v1819
        %v1821 = vrot.slane %v1820, 1
        %v1822 = vadd.f32 %v1820, %v1821
        %v1823 = vmul.f32 %v1801, 0.00390625
        %v1824 = vmul.f32 %v1808, 0.00390625
        %v1825 = vmul.f32 %v1815, 0.00390625
        %v1826 = vmul.f32 %v1822, 0.00390625
        %v1827 = vmax.f32 %v1482, %v1486
        %v1828 = vrot.slane %v1827, 4
        %v1829 = vmax.f32 %v1827, %v1828
        %v1830 = vrot.slane %v1829, 2
        %v1831 = vmax.f32 %v1829, %v1830
        %v1832 = vrot.slane %v1831, 1
        %v1833 = vmax.f32 %v1831, %v1832
        %v1834 = vmax.f32 %v1483, %v1487
        %v1835 = vrot.slane %v1834, 4
        %v1836 = vmax.f32 %v1834, %v1835
        %v1837 = vrot.slane %v1836, 2
        %v1838 = vmax.f32 %v1836, %v1837
        %v1839 = vrot.slane %v1838, 1
        %v1840 = vmax.f32 %v1838, %v1839
        %v1841 = vmax.f32 %v1484, %v1488
        %v1842 = vrot.slane %v1841, 4
        %v1843 = vmax.f32 %v1841, %v1842
        %v1844 = vrot.slane %v1843, 2
        %v1845 = vmax.f32 %v1843, %v1844
        %v1846 = vrot.slane %v1845, 1
        %v1847 = vmax.f32 %v1845, %v1846
        %v1848 = vmax.f32 %v1485, %v1489
        %v1849 = vrot.slane %v1848, 4
        %v1850 = vmax.f32 %v1848, %v1849
        %v1851 = vrot.slane %v1850, 2
        %v1852 = vmax.f32 %v1850, %v1851
        %v1853 = vrot.slane %v1852, 1
        %v1854 = vmax.f32 %v1852, %v1853
        %vm1855 = vcmask 1040384
        %v1856 = vsel %vm1855, %v662, %v672
        %v1857 = vsel %vm1855, %v663, %v679
        %v1858 = vsel %vm1855, %v664, %v686
        %v1859 = vsel %vm1855, %v665, %v693
        %vm1860 = vcmask 1041408
        %v1861 = vsel %vm1860, %v1856, %v1049
        %v1862 = vsel %vm1860, %v1857, %v1050
        %v1863 = vsel %vm1860, %v1858, %v1051
        %v1864 = vsel %vm1860, %v1859, %v1052
        %vm1865 = vcmask 1042432
        %v1866 = vsel %vm1865, %v1861, %v1059
        %v1867 = vsel %vm1865, %v1862, %v1066
        %v1868 = vsel %vm1865, %v1863, %v1073
        %v1869 = vsel %vm1865, %v1864, %v1080
        %vm1870 = vcmask 1043456
        %v1871 = vsel %vm1870, %v1866, %v1436
        %v1872 = vsel %vm1870, %v1867, %v1437
        %v1873 = vsel %vm1870, %v1868, %v1438
        %v1874 = vsel %vm1870, %v1869, %v1439
        %vm1875 = vcmask 1044480
        %v1876 = vsel %vm1875, %v1871, %v1446
        %v1877 = vsel %vm1875, %v1872, %v1453
        %v1878 = vsel %vm1875, %v1873, %v1460
        %v1879 = vsel %vm1875, %v1874, %v1467
        %vm1880 = vcmask 1045504
        %v1881 = vsel %vm1880, %v1876, %v1823
        %v1882 = vsel %vm1880, %v1877, %v1824
        %v1883 = vsel %vm1880, %v1878, %v1825
        %v1884 = vsel %vm1880, %v1879, %v1826
        %vm1885 = vcmask 1046528
        %v1886 = vsel %vm1885, %v1881, %v1833
        %v1887 = vsel %vm1885, %v1882, %v1840
        %v1888 = vsel %vm1885, %v1883, %v1847
        %v1889 = vsel %vm1885, %v1884, %v1854
        %1890 = vst [vmem:[%s272] sm:$0xff] %v1886
        %1891 = vst [vmem:[%s272 + $0x8] sm:$0xff] %v1887
        %1892 = vst [vmem:[%s272 + $0x10] sm:$0xff] %v1888
        %1893 = vst [vmem:[%s272 + $0x18] sm:$0xff] %v1889
        %s1894 = smul.u32 4, %s14
        %p1895 = scmp.lt.s32.totalorder %s1894, 15
        %s1896 = scalar_select %p1895, %s1894, 15
        %s1897 = smul.addr %s1896, 8
        %s1898 = scalar_lea.vmem %s3, %s1897
        // Predicated region
        $region84: #{two_view_net_forward.1} parent=50 // pred_check
          %p1899 = pneg %p105
        $region85: #{two_view_net_forward.1} parent=50 // pred_check_branch
          %1901 = sbr.rel (%p1899) target = $region87
        $region86: #{two_view_net_forward.1} parent=50 // pred_region
          %s1902 = smul.u32 4, %s14
        $region87: #{two_view_net_forward.1} parent=50 // pred_fallthru
          _
      $region51: #{two_view_net_forward.1} parent=5 // pred_fallthru
        _
      %p1903 = scmp.le.s32.totalorder 2, %s9
      // Predicated region
      $region88: #{two_view_net_forward.1} parent=5 // pred_check
        %p1904 = pneg %p1903
      $region89: #{two_view_net_forward.1} parent=5 // pred_check_branch
        %1906 = sbr.rel (%p1904) target = $region91
      $region90: #{two_view_net_forward.1} parent=5 // pred_region
        %s1907 = ssub.s32 %s9, 2
        // Predicated region
        $region92: #{two_view_net_forward.1} parent=90 // pred_check
          %p1908 = pneg %p111
        $region93: #{two_view_net_forward.1} parent=90 // pred_check_branch
          %1910 = sbr.rel (%p1908) target = $region95
        $region94: #{two_view_net_forward.1} parent=90 // pred_region
          %s1911 = smul.u32 4, %s15
          %p1912 = scmp.lt.s32.totalorder %s1911, 15
          %s1913 = scalar_select %p1912, %s1911, 15
          %s1914 = smul.addr %s1913, 8
          %s1915 = scalar_lea.vmem %s3, %s1914
        $region95: #{two_view_net_forward.1} parent=90 // pred_fallthru
          _
      $region91: #{two_view_net_forward.1} parent=5 // pred_fallthru
        _
    $region6: #{two_view_net_forward.1} parent=1 // loop_footer
      %s13 = sadd.s32 1, %s9
    $region7: #{two_view_net_forward.1} parent=1 // loop_footer_branch
      %8 = sbr.rel target = $region3
    $region8: #{two_view_net_forward.1} parent=1 // loop_exit
      _

</llo_original>
